<compile_context>
chip_gen: v7x
topology: tpu7x:2x2x1
jax: 0.10.0
libtpu: 0.0.40
codegen_flags: <defaults>
</compile_context>

<pallas_src>
import functools

import jax
import jax.numpy as jnp
from jax.experimental import pallas as pl
from jax.experimental.pallas import tpu as pltpu

GRU_HIDDEN = 256
VALUE_SIZE = 128
ADV_SIZE = 128
LANE = 128


def _round_up(x, m):
    return (x + m - 1) // m * m


def _pick_time_chunk(T, max_chunk=256):
    """Largest divisor of T up to max_chunk (amortizes per-grid-step overhead)."""
    best = 1
    for c in range(1, min(T, max_chunk) + 1):
        if T % c == 0:
            best = c
    return best


def _pick_batch_tile(b_pad, max_tile=128):
    """b_pad is a multiple of 8.  Prefer >=2 tiles (so the 'parallel' batch axis
    can occupy v7x's second TensorCore) while keeping per-tile scratch bounded."""
    candidates = [bt for bt in range(8, min(b_pad, max_tile) + 1, 8)
                  if b_pad % bt == 0 and bt < b_pad]
    return max(candidates) if candidates else b_pad


def _vmem_limit_bytes(resident_bytes):
    """Request a larger scoped-VMEM limit only when needed, clamped to the chip."""
    # Default scoped VMEM is 16 MiB on v5e / 32 MiB on v6e/v7x; request above the
    # smallest default so the same kernel compiles on v5e too.
    if resident_bytes <= 12 * 1024 * 1024:
        return None
    try:
        cap = int(getattr(pltpu.get_tpu_info(), "vmem_capacity_bytes",
                          64 * 1024 * 1024))
    except Exception:
        cap = 64 * 1024 * 1024  # conservative: v7x per-TensorCore VMEM
    return min(int(resident_bytes * 1.25) + (1 << 20), int(cap * 9 // 10))


def _duel_gru_kernel(x_ref,                  # (t_chunk*bt, S)  time-major rows of this (b,t) block
                     wih_ref, bih_ref,       # (S, 3H), (1, 3H)   gate order [r|z|n]; b_hh[:2H] folded in
                     whh_ref, bhn_ref,       # (H, 3H), (1, H)    n-gate hidden bias kept separate
                     wh1_ref, bh1_ref,       # (H, V+A1), (1, V+A1)  fused head L1
                     wh2_ref, bh2_ref,       # (V+A1, a_pad), (1, a_pad)  block-diag fused head L2
                     q_ref,                  # (bt, a_pad) lane-dense output
                     h_ref,                  # (bt, H) persistent VMEM scratch (per batch tile)
                     gi_ref,                 # (t_chunk*bt, 3H) f32 scratch (hoisted input projection)
                     *, n_actions, unroll):
    bt, H = h_ref.shape
    t_chunk = gi_ref.shape[0] // bt

    tc = pl.program_id(1)          # time-chunk index (innermost, "arbitrary")
    n_tc = pl.num_programs(1)

    # h0 = zeros at the first time chunk of each batch tile (PyTorch default).
    @pl.when(tc == 0)
    def _():
        h_ref[...] = jnp.zeros_like(h_ref)

    # --- Hoisted input projection: ONE MXU matmul for the whole chunk. ---
    gi_ref[...] = (jnp.dot(x_ref[...], wih_ref[...],
                           preferred_element_type=jnp.float32)
                   + bih_ref[...])                               # (t_chunk*bt, 3H) f32

    whh = whh_ref[...]
    # Hoist the (1,H)->(bt,H) n-gate bias broadcast out of the step loop.
    bhn = jnp.broadcast_to(bhn_ref[...], (bt, H))

    # --- Recurrence: h carried in registers, tile-aligned dynamic slices. ---
    def step(t, h):
        off = pl.multiple_of(t * bt, 8)
        gi = gi_ref[pl.ds(off, bt), :]                           # (bt, 3H) f32
        gh = jnp.dot(h.astype(whh.dtype), whh,
                     preferred_element_type=jnp.float32)         # (bt, 3H) f32
        r = jax.nn.sigmoid(gi[:, :H] + gh[:, :H])
        z = jax.nn.sigmoid(gi[:, H:2 * H] + gh[:, H:2 * H])
        n = jnp.tanh(gi[:, 2 * H:] + r * (gh[:, 2 * H:] + bhn))
        return n + z * (h - n)                                   # == (1-z)*n + z*h

    h = jax.lax.fori_loop(0, t_chunk, step, h_ref[...], unroll=unroll)
    h_ref[...] = h                                               # persist across time chunks

    # --- Dueling heads: only after the final time chunk. ---
    @pl.when(tc == n_tc - 1)
    def _():
        hcat = jnp.maximum(
            jnp.dot(h.astype(wh1_ref.dtype), wh1_ref[...],
                    preferred_element_type=jnp.float32) + bh1_ref[...], 0.0)   # (bt, V+A1)
        out = (jnp.dot(hcat.astype(wh2_ref.dtype), wh2_ref[...],
                       preferred_element_type=jnp.float32) + bh2_ref[...])     # (bt, a_pad)
        a_pad = out.shape[1]
        # Block-diagonal fusion: cols [:A] = advantages, col a_pad-1 = value,
        # every other column is exactly zero (required invariant for the mean).
        value = out[:, a_pad - 1:]                               # (bt, 1)
        sum_adv = jnp.sum(out, axis=1, keepdims=True) - value
        q_ref[...] = value + (out - sum_adv * (1.0 / n_actions)) # lane-dense store


def init_params(key, state_size, action_size):
    """Synthetic parameters matching the PyTorch module shapes (transposed).

    PyTorch stores weight_ih as (3H, S); we keep (S, 3H) so matmuls are x @ W.
    Gate order is [r, z, n] like PyTorch.
    """
    H, V, A1 = GRU_HIDDEN, VALUE_SIZE, ADV_SIZE
    ks = jax.random.split(key, 12)
    s = 0.05
    return {
        "w_ih": s * jax.random.normal(ks[0], (state_size, 3 * H), jnp.float32),
        "b_ih": s * jax.random.normal(ks[1], (1, 3 * H), jnp.float32),
        "w_hh": s * jax.random.normal(ks[2], (H, 3 * H), jnp.float32),
        "b_hh": s * jax.random.normal(ks[3], (1, 3 * H), jnp.float32),
        "w_v1": s * jax.random.normal(ks[4], (H, V), jnp.float32),
        "b_v1": s * jax.random.normal(ks[5], (1, V), jnp.float32),
        "w_v2": s * jax.random.normal(ks[6], (V, 1), jnp.float32),
        "b_v2": s * jax.random.normal(ks[7], (1, 1), jnp.float32),
        "w_a1": s * jax.random.normal(ks[8], (H, A1), jnp.float32),
        "b_a1": s * jax.random.normal(ks[9], (1, A1), jnp.float32),
        "w_a2": s * jax.random.normal(ks[10], (A1, action_size), jnp.float32),
        "b_a2": s * jax.random.normal(ks[11], (1, action_size), jnp.float32),
    }


@functools.partial(jax.jit, static_argnames=("t_chunk", "compute_dtype"))
def duel_q_gru_forward(state, params, *, t_chunk=None, compute_dtype=jnp.bfloat16):
    """state: (B, T, S) float32 -> q: (B, action_size) float32."""
    B, T, S = state.shape
    H, V, A1 = GRU_HIDDEN, VALUE_SIZE, ADV_SIZE
    A = params["w_a2"].shape[1]
    a_pad = _round_up(max(A + 1, LANE), LANE)   # +1: value rides in the last padded lane

    # Pad batch to a full sublane tile; pick a batch tile (>=2 tiles when possible
    # so the "parallel" grid axis can use v7x's second TensorCore).
    b_pad = _round_up(B, 8)
    bt = _pick_batch_tile(b_pad)
    nb = b_pad // bt

    if t_chunk is None:
        t_chunk = _pick_time_chunk(T)
    assert T % t_chunk == 0, "t_chunk must divide the sequence length"
    nt = T // t_chunk
    rows = t_chunk * bt
    unroll = min(t_chunk, 8)

    # Per-batch-tile, time-major rows: x_r[b, t*bt + j, :] = state[b*bt + j, t, :].
    x_tm = jnp.transpose(state, (1, 0, 2))                       # (T, B, S)
    if b_pad != B:
        x_tm = jnp.pad(x_tm, ((0, 0), (0, b_pad - B), (0, 0)))
    x_r = (x_tm.reshape(T, nb, bt, S)
               .transpose(1, 0, 2, 3)
               .reshape(nb, T * bt, S)
               .astype(compute_dtype))

    # --- Weight prep (once, outside the kernel) ---------------------------------
    # Fold b_hh[:, :2H] into b_ih (r/z gates); keep only the n-gate hidden bias.
    b_ih_f = (params["b_ih"]
              + jnp.concatenate([params["b_hh"][:, :2 * H],
                                 jnp.zeros((1, H), jnp.float32)], axis=1)
              ).astype(jnp.float32)
    b_hn = params["b_hh"][:, 2 * H:].astype(jnp.float32)          # (1, H)
    w_ih = params["w_ih"].astype(compute_dtype)
    w_hh = params["w_hh"].astype(compute_dtype)

    # Fused head L1: [value | advantage] first layers in one (H, V+A1) matmul.
    w_h1 = jnp.concatenate([params["w_v1"], params["w_a1"]], axis=1).astype(compute_dtype)
    b_h1 = jnp.concatenate([params["b_v1"], params["b_a1"]], axis=1).astype(jnp.float32)

    # Fused head L2: block-diagonal (V+A1, a_pad).  Advantage -> cols [:A],
    # value -> col a_pad-1, every other column EXACTLY zero (zero is exact in
    # bf16, keeping the row-sum-minus-value average correct).
    w_h2 = jnp.zeros((V + A1, a_pad), jnp.float32)
    w_h2 = w_h2.at[V:, :A].set(params["w_a2"])
    w_h2 = w_h2.at[:V, a_pad - 1].set(params["w_v2"][:, 0])
    w_h2 = w_h2.astype(compute_dtype)
    b_h2 = jnp.zeros((1, a_pad), jnp.float32)
    b_h2 = b_h2.at[0, :A].set(params["b_a2"][0])
    b_h2 = b_h2.at[0, a_pad - 1].set(params["b_v2"][0, 0])

    kernel = functools.partial(_duel_gru_kernel, n_actions=A, unroll=unroll)

    const = lambda b, t: (0, 0)   # weights/biases: same block every grid step
    in_specs = [
        pl.BlockSpec((None, rows, S), lambda b, t: (b, t, 0)),    # x: per (batch tile, time chunk)
        pl.BlockSpec((S, 3 * H), const),
        pl.BlockSpec((1, 3 * H), const),
        pl.BlockSpec((H, 3 * H), const),
        pl.BlockSpec((1, H), const),
        pl.BlockSpec((H, V + A1), const),
        pl.BlockSpec((1, V + A1), const),
        pl.BlockSpec((V + A1, a_pad), const),
        pl.BlockSpec((1, a_pad), const),
    ]
    out_spec = pl.BlockSpec((bt, a_pad), lambda b, t: (b, 0))

    # Rough resident-VMEM estimate (BlockSpec double-buffers blocks) + scratch.
    itemsize = jnp.dtype(compute_dtype).itemsize
    weight_bytes = (S * 3 * H + H * 3 * H + H * (V + A1) + (V + A1) * a_pad) * itemsize
    bias_bytes = (3 * H + H + (V + A1) + a_pad) * 4
    block_bytes = rows * S * itemsize + weight_bytes + bias_bytes + bt * a_pad * 4
    scratch_bytes = (bt * H + rows * 3 * H) * 4
    vmem_limit = _vmem_limit_bytes(2 * block_bytes + scratch_bytes)

    cp_kwargs = dict(dimension_semantics=("parallel", "arbitrary"))
    if vmem_limit is not None:
        cp_kwargs["vmem_limit_bytes"] = vmem_limit

    q_pad = pl.pallas_call(
        kernel,
        out_shape=jax.ShapeDtypeStruct((b_pad, a_pad), jnp.float32),
        grid=(nb, nt),
        in_specs=in_specs,
        out_specs=out_spec,
        scratch_shapes=[pltpu.VMEM((bt, H), jnp.float32),
                        pltpu.VMEM((rows, 3 * H), jnp.float32)],
        compiler_params=pltpu.CompilerParams(**cp_kwargs),
    )(x_r, w_ih, b_ih_f, w_hh, b_hn, w_h1, b_h1, w_h2, b_h2)

    return q_pad[:B, :A]


def _reference_forward(state, params):
    """Pure-JAX reference implementing the PyTorch semantics exactly."""
    B, T, S = state.shape
    H = GRU_HIDDEN
    h = jnp.zeros((B, H), jnp.float32)
    for t in range(T):
        x_t = state[:, t, :]
        gi = x_t @ params["w_ih"] + params["b_ih"]
        gh = h @ params["w_hh"] + params["b_hh"]
        i_r, i_z, i_n = gi[:, :H], gi[:, H:2 * H], gi[:, 2 * H:]
        h_r, h_z, h_n = gh[:, :H], gh[:, H:2 * H], gh[:, 2 * H:]
        r = jax.nn.sigmoid(i_r + h_r)
        z = jax.nn.sigmoid(i_z + h_z)
        n = jnp.tanh(i_n + r * h_n)
        h = (1.0 - z) * n + z * h
    v = jnp.maximum(h @ params["w_v1"] + params["b_v1"], 0.0)
    value = v @ params["w_v2"] + params["b_v2"]
    a = jnp.maximum(h @ params["w_a1"] + params["b_a1"], 0.0)
    adv = a @ params["w_a2"] + params["b_a2"]
    return value + (adv - adv.mean(axis=1, keepdims=True))


if __name__ == "__main__":
    key = jax.random.PRNGKey(0)
    k_param, k_state = jax.random.split(key)

    batch = 2
    seq = 8
    state_size = 16
    action_size = 4

    params = init_params(k_param, state_size, action_size)
    state = jax.random.normal(k_state, (batch, seq, state_size), jnp.float32)

    # Default (bf16 MXU path) with t_chunk=4: exercises the 2-chunk time grid,
    # persistent-h scratch and the pl.when init/finalize guards.
    q = duel_q_gru_forward(state, params, t_chunk=4)
    q = jax.block_until_ready(q)

    # f32 path (single chunk) for an exact check against the reference.
    q_f32 = duel_q_gru_forward(state, params, compute_dtype=jnp.float32)
    q_f32 = jax.block_until_ready(q_f32)

    q_ref = _reference_forward(state, params)
    assert q.shape == (batch, action_size)
    assert q_f32.shape == (batch, action_size)
    assert jnp.allclose(q_f32, q_ref, rtol=1e-3, atol=1e-4), "f32 mismatch vs reference"
    assert jnp.allclose(q, q_ref, rtol=2e-2, atol=2e-2), "bf16 mismatch vs reference"

    print("KERNEL_OK")
</pallas_src>

<mosaic_0001>
module attributes {stable_mosaic.version = 11 : i64} {
  func.func @_duel_gru_kernel(%arg0: i32, %arg1: i32, %arg2: memref<1x32x16xbf16, #tpu.memory_space<vmem>>, %arg3: memref<16x768xbf16, #tpu.memory_space<vmem>>, %arg4: memref<1x768xf32, #tpu.memory_space<vmem>>, %arg5: memref<256x768xbf16, #tpu.memory_space<vmem>>, %arg6: memref<1x256xf32, #tpu.memory_space<vmem>>, %arg7: memref<256x256xbf16, #tpu.memory_space<vmem>>, %arg8: memref<1x256xf32, #tpu.memory_space<vmem>>, %arg9: memref<256x128xbf16, #tpu.memory_space<vmem>>, %arg10: memref<1x128xf32, #tpu.memory_space<vmem>>, %arg11: memref<8x128xf32, #tpu.memory_space<vmem>>, %arg12: memref<8x256xf32, #tpu.memory_space<vmem>>, %arg13: memref<32x768xf32, #tpu.memory_space<vmem>>) attributes {dimension_semantics = [#tpu.dimension_semantics<parallel>, #tpu.dimension_semantics<arbitrary>], iteration_bounds = array<i64: 1, 2>, scalar_prefetch = 0 : i64, scratch_operands = 2 : i64, tpu.core_type = #tpu.core_type<tc>, window_params = [{transform_indices = @transform_0, window_bounds = array<i64: 1, 32, 16>}, {pipeline_mode = #tpu.pipeline_mode<synchronous>, transform_indices = @transform_1, window_bounds = array<i64: 16, 768>}, {pipeline_mode = #tpu.pipeline_mode<synchronous>, transform_indices = @transform_2, window_bounds = array<i64: 1, 768>}, {pipeline_mode = #tpu.pipeline_mode<synchronous>, transform_indices = @transform_3, window_bounds = array<i64: 256, 768>}, {pipeline_mode = #tpu.pipeline_mode<synchronous>, transform_indices = @transform_4, window_bounds = array<i64: 1, 256>}, {pipeline_mode = #tpu.pipeline_mode<synchronous>, transform_indices = @transform_5, window_bounds = array<i64: 256, 256>}, {pipeline_mode = #tpu.pipeline_mode<synchronous>, transform_indices = @transform_6, window_bounds = array<i64: 1, 256>}, {pipeline_mode = #tpu.pipeline_mode<synchronous>, transform_indices = @transform_7, window_bounds = array<i64: 256, 128>}, {pipeline_mode = #tpu.pipeline_mode<synchronous>, transform_indices = @transform_8, window_bounds = array<i64: 1, 128>}, {transform_indices = @transform_9, window_bounds = array<i64: 8, 128>}]} {
    %c0_i32 = arith.constant 0 : i32
    %0 = arith.cmpi eq, %arg1, %c0_i32 : i32
    %1 = arith.extui %0 : i1 to i32
    %c0_i32_0 = arith.constant 0 : i32
    %2 = arith.cmpi ne, %1, %c0_i32_0 : i32
    scf.if %2 {
      %cst_39 = arith.constant 0.000000e+00 : f32
      %144 = vector.broadcast %cst_39 : f32 to vector<8x256xf32>
      %c0_40 = arith.constant 0 : index
      %c0_41 = arith.constant 0 : index
      %145 = vector.load %arg12[%c0_40, %c0_41] : memref<8x256xf32, #tpu.memory_space<vmem>>, vector<8x256xf32>
      tpu.vector_store %arg12[%c0_40, %c0_41], %144 {strides = array<i32>} : memref<8x256xf32, #tpu.memory_space<vmem>>, vector<8x256xf32>,
    } else {
    }
    %c0 = arith.constant 0 : index
    %c0_1 = arith.constant 0 : index
    %c0_2 = arith.constant 0 : index
    %3 = vector.load %arg2[%c0, %c0_1, %c0_2] : memref<1x32x16xbf16, #tpu.memory_space<vmem>>, vector<1x32x16xbf16>
    %4 = vector.shape_cast %3 : vector<1x32x16xbf16> to vector<32x16xbf16>
    %c0_3 = arith.constant 0 : index
    %c0_4 = arith.constant 0 : index
    %5 = vector.load %arg3[%c0_3, %c0_4] : memref<16x768xbf16, #tpu.memory_space<vmem>>, vector<16x768xbf16>
    %cst = arith.constant dense<0.000000e+00> : vector<32x768xf32>
    %6 = tpu.matmul %4, %5, %cst {dimension_numbers = #tpu.dot_dimension_numbers<[1], [0], [0], [1], [0, 0, 1, 1], [], []>} : vector<32x16xbf16>, vector<16x768xbf16>, vector<32x768xf32> -> vector<32x768xf32>
    %c0_5 = arith.constant 0 : index
    %c0_6 = arith.constant 0 : index
    %7 = vector.load %arg4[%c0_5, %c0_6] : memref<1x768xf32, #tpu.memory_space<vmem>>, vector<1x768xf32>
    %8 = vector.broadcast %7 : vector<1x768xf32> to vector<32x768xf32>
    %9 = arith.addf %6, %8 : vector<32x768xf32>
    %c0_7 = arith.constant 0 : index
    %c0_8 = arith.constant 0 : index
    %10 = vector.load %arg13[%c0_7, %c0_8] : memref<32x768xf32, #tpu.memory_space<vmem>>, vector<32x768xf32>
    tpu.vector_store %arg13[%c0_7, %c0_8], %9 {strides = array<i32>} : memref<32x768xf32, #tpu.memory_space<vmem>>, vector<32x768xf32>,
    %c0_9 = arith.constant 0 : index
    %c0_10 = arith.constant 0 : index
    %11 = vector.load %arg5[%c0_9, %c0_10] : memref<256x768xbf16, #tpu.memory_space<vmem>>, vector<256x768xbf16>
    %c0_11 = arith.constant 0 : index
    %c0_12 = arith.constant 0 : index
    %12 = vector.load %arg6[%c0_11, %c0_12] : memref<1x256xf32, #tpu.memory_space<vmem>>, vector<1x256xf32>
    %13 = vector.shape_cast %12 : vector<1x256xf32> to vector<1x256xf32>
    %14 = vector.broadcast %13 : vector<1x256xf32> to vector<8x256xf32>
    %c0_13 = arith.constant 0 : index
    %c0_14 = arith.constant 0 : index
    %15 = vector.load %arg12[%c0_13, %c0_14] : memref<8x256xf32, #tpu.memory_space<vmem>>, vector<8x256xf32>
    %c0_i32_15 = arith.constant 0 : i32
    %c8_i32 = arith.constant 8 : i32
    %16 = arith.muli %c0_i32_15, %c8_i32 : i32
    %17 = tpu.assume_multiple %16, 8 : i32
    %18 = arith.index_cast %17 : i32 to index
    %c0_16 = arith.constant 0 : index
    %19 = vector.load %arg13[%18, %c0_16] : memref<32x768xf32, #tpu.memory_space<vmem>>, vector<8x768xf32>
    %20 = arith.truncf %15 : vector<8x256xf32> to vector<8x256xbf16>
    %cst_17 = arith.constant dense<0.000000e+00> : vector<8x768xf32>
    %21 = tpu.matmul %20, %11, %cst_17 {dimension_numbers = #tpu.dot_dimension_numbers<[1], [0], [0], [1], [0, 0, 1, 1], [], []>} : vector<8x256xbf16>, vector<256x768xbf16>, vector<8x768xf32> -> vector<8x768xf32>
    %22 = vector.extract_strided_slice %19 {offsets = [0, 0], sizes = [8, 256], strides = [1, 1]} : vector<8x768xf32> to vector<8x256xf32>
    %23 = vector.extract_strided_slice %21 {offsets = [0, 0], sizes = [8, 256], strides = [1, 1]} : vector<8x768xf32> to vector<8x256xf32>
    %24 = arith.addf %22, %23 : vector<8x256xf32>
    %25 = arith.negf %24 : vector<8x256xf32>
    %26 = math.exp %25 : vector<8x256xf32>
    %cst_18 = arith.constant 1.000000e+00 : f32
    %27 = vector.broadcast %cst_18 : f32 to vector<8x256xf32>
    %28 = arith.addf %27, %26 : vector<8x256xf32>
    %29 = arith.divf %27, %28 : vector<8x256xf32>
    %30 = vector.extract_strided_slice %19 {offsets = [0, 256], sizes = [8, 256], strides = [1, 1]} : vector<8x768xf32> to vector<8x256xf32>
    %31 = vector.extract_strided_slice %21 {offsets = [0, 256], sizes = [8, 256], strides = [1, 1]} : vector<8x768xf32> to vector<8x256xf32>
    %32 = arith.addf %30, %31 : vector<8x256xf32>
    %33 = arith.negf %32 : vector<8x256xf32>
    %34 = math.exp %33 : vector<8x256xf32>
    %cst_19 = arith.constant 1.000000e+00 : f32
    %35 = vector.broadcast %cst_19 : f32 to vector<8x256xf32>
    %36 = arith.addf %35, %34 : vector<8x256xf32>
    %37 = arith.divf %35, %36 : vector<8x256xf32>
    %38 = vector.extract_strided_slice %19 {offsets = [0, 512], sizes = [8, 256], strides = [1, 1]} : vector<8x768xf32> to vector<8x256xf32>
    %39 = vector.extract_strided_slice %21 {offsets = [0, 512], sizes = [8, 256], strides = [1, 1]} : vector<8x768xf32> to vector<8x256xf32>
    %40 = arith.addf %39, %14 : vector<8x256xf32>
    %41 = arith.mulf %29, %40 : vector<8x256xf32>
    %42 = arith.addf %38, %41 : vector<8x256xf32>
    %43 = math.tanh %42 : vector<8x256xf32>
    %44 = arith.subf %15, %43 : vector<8x256xf32>
    %45 = arith.mulf %37, %44 : vector<8x256xf32>
    %46 = arith.addf %43, %45 : vector<8x256xf32>
    %c1_i32 = arith.constant 1 : i32
    %c8_i32_20 = arith.constant 8 : i32
    %47 = arith.muli %c1_i32, %c8_i32_20 : i32
    %48 = tpu.assume_multiple %47, 8 : i32
    %49 = arith.index_cast %48 : i32 to index
    %c0_21 = arith.constant 0 : index
    %50 = vector.load %arg13[%49, %c0_21] : memref<32x768xf32, #tpu.memory_space<vmem>>, vector<8x768xf32>
    %51 = arith.truncf %46 : vector<8x256xf32> to vector<8x256xbf16>
    %cst_22 = arith.constant dense<0.000000e+00> : vector<8x768xf32>
    %52 = tpu.matmul %51, %11, %cst_22 {dimension_numbers = #tpu.dot_dimension_numbers<[1], [0], [0], [1], [0, 0, 1, 1], [], []>} : vector<8x256xbf16>, vector<256x768xbf16>, vector<8x768xf32> -> vector<8x768xf32>
    %53 = vector.extract_strided_slice %50 {offsets = [0, 0], sizes = [8, 256], strides = [1, 1]} : vector<8x768xf32> to vector<8x256xf32>
    %54 = vector.extract_strided_slice %52 {offsets = [0, 0], sizes = [8, 256], strides = [1, 1]} : vector<8x768xf32> to vector<8x256xf32>
    %55 = arith.addf %53, %54 : vector<8x256xf32>
    %56 = arith.negf %55 : vector<8x256xf32>
    %57 = math.exp %56 : vector<8x256xf32>
    %cst_23 = arith.constant 1.000000e+00 : f32
    %58 = vector.broadcast %cst_23 : f32 to vector<8x256xf32>
    %59 = arith.addf %58, %57 : vector<8x256xf32>
    %60 = arith.divf %58, %59 : vector<8x256xf32>
    %61 = vector.extract_strided_slice %50 {offsets = [0, 256], sizes = [8, 256], strides = [1, 1]} : vector<8x768xf32> to vector<8x256xf32>
    %62 = vector.extract_strided_slice %52 {offsets = [0, 256], sizes = [8, 256], strides = [1, 1]} : vector<8x768xf32> to vector<8x256xf32>
    %63 = arith.addf %61, %62 : vector<8x256xf32>
    %64 = arith.negf %63 : vector<8x256xf32>
    %65 = math.exp %64 : vector<8x256xf32>
    %cst_24 = arith.constant 1.000000e+00 : f32
    %66 = vector.broadcast %cst_24 : f32 to vector<8x256xf32>
    %67 = arith.addf %66, %65 : vector<8x256xf32>
    %68 = arith.divf %66, %67 : vector<8x256xf32>
    %69 = vector.extract_strided_slice %50 {offsets = [0, 512], sizes = [8, 256], strides = [1, 1]} : vector<8x768xf32> to vector<8x256xf32>
    %70 = vector.extract_strided_slice %52 {offsets = [0, 512], sizes = [8, 256], strides = [1, 1]} : vector<8x768xf32> to vector<8x256xf32>
    %71 = arith.addf %70, %14 : vector<8x256xf32>
    %72 = arith.mulf %60, %71 : vector<8x256xf32>
    %73 = arith.addf %69, %72 : vector<8x256xf32>
    %74 = math.tanh %73 : vector<8x256xf32>
    %75 = arith.subf %46, %74 : vector<8x256xf32>
    %76 = arith.mulf %68, %75 : vector<8x256xf32>
    %77 = arith.addf %74, %76 : vector<8x256xf32>
    %c2_i32 = arith.constant 2 : i32
    %c8_i32_25 = arith.constant 8 : i32
    %78 = arith.muli %c2_i32, %c8_i32_25 : i32
    %79 = tpu.assume_multiple %78, 8 : i32
    %80 = arith.index_cast %79 : i32 to index
    %c0_26 = arith.constant 0 : index
    %81 = vector.load %arg13[%80, %c0_26] : memref<32x768xf32, #tpu.memory_space<vmem>>, vector<8x768xf32>
    %82 = arith.truncf %77 : vector<8x256xf32> to vector<8x256xbf16>
    %cst_27 = arith.constant dense<0.000000e+00> : vector<8x768xf32>
    %83 = tpu.matmul %82, %11, %cst_27 {dimension_numbers = #tpu.dot_dimension_numbers<[1], [0], [0], [1], [0, 0, 1, 1], [], []>} : vector<8x256xbf16>, vector<256x768xbf16>, vector<8x768xf32> -> vector<8x768xf32>
    %84 = vector.extract_strided_slice %81 {offsets = [0, 0], sizes = [8, 256], strides = [1, 1]} : vector<8x768xf32> to vector<8x256xf32>
    %85 = vector.extract_strided_slice %83 {offsets = [0, 0], sizes = [8, 256], strides = [1, 1]} : vector<8x768xf32> to vector<8x256xf32>
    %86 = arith.addf %84, %85 : vector<8x256xf32>
    %87 = arith.negf %86 : vector<8x256xf32>
    %88 = math.exp %87 : vector<8x256xf32>
    %cst_28 = arith.constant 1.000000e+00 : f32
    %89 = vector.broadcast %cst_28 : f32 to vector<8x256xf32>
    %90 = arith.addf %89, %88 : vector<8x256xf32>
    %91 = arith.divf %89, %90 : vector<8x256xf32>
    %92 = vector.extract_strided_slice %81 {offsets = [0, 256], sizes = [8, 256], strides = [1, 1]} : vector<8x768xf32> to vector<8x256xf32>
    %93 = vector.extract_strided_slice %83 {offsets = [0, 256], sizes = [8, 256], strides = [1, 1]} : vector<8x768xf32> to vector<8x256xf32>
    %94 = arith.addf %92, %93 : vector<8x256xf32>
    %95 = arith.negf %94 : vector<8x256xf32>
    %96 = math.exp %95 : vector<8x256xf32>
    %cst_29 = arith.constant 1.000000e+00 : f32
    %97 = vector.broadcast %cst_29 : f32 to vector<8x256xf32>
    %98 = arith.addf %97, %96 : vector<8x256xf32>
    %99 = arith.divf %97, %98 : vector<8x256xf32>
    %100 = vector.extract_strided_slice %81 {offsets = [0, 512], sizes = [8, 256], strides = [1, 1]} : vector<8x768xf32> to vector<8x256xf32>
    %101 = vector.extract_strided_slice %83 {offsets = [0, 512], sizes = [8, 256], strides = [1, 1]} : vector<8x768xf32> to vector<8x256xf32>
    %102 = arith.addf %101, %14 : vector<8x256xf32>
    %103 = arith.mulf %91, %102 : vector<8x256xf32>
    %104 = arith.addf %100, %103 : vector<8x256xf32>
    %105 = math.tanh %104 : vector<8x256xf32>
    %106 = arith.subf %77, %105 : vector<8x256xf32>
    %107 = arith.mulf %99, %106 : vector<8x256xf32>
    %108 = arith.addf %105, %107 : vector<8x256xf32>
    %c3_i32 = arith.constant 3 : i32
    %c8_i32_30 = arith.constant 8 : i32
    %109 = arith.muli %c3_i32, %c8_i32_30 : i32
    %110 = tpu.assume_multiple %109, 8 : i32
    %111 = arith.index_cast %110 : i32 to index
    %c0_31 = arith.constant 0 : index
    %112 = vector.load %arg13[%111, %c0_31] : memref<32x768xf32, #tpu.memory_space<vmem>>, vector<8x768xf32>
    %113 = arith.truncf %108 : vector<8x256xf32> to vector<8x256xbf16>
    %cst_32 = arith.constant dense<0.000000e+00> : vector<8x768xf32>
    %114 = tpu.matmul %113, %11, %cst_32 {dimension_numbers = #tpu.dot_dimension_numbers<[1], [0], [0], [1], [0, 0, 1, 1], [], []>} : vector<8x256xbf16>, vector<256x768xbf16>, vector<8x768xf32> -> vector<8x768xf32>
    %115 = vector.extract_strided_slice %112 {offsets = [0, 0], sizes = [8, 256], strides = [1, 1]} : vector<8x768xf32> to vector<8x256xf32>
    %116 = vector.extract_strided_slice %114 {offsets = [0, 0], sizes = [8, 256], strides = [1, 1]} : vector<8x768xf32> to vector<8x256xf32>
    %117 = arith.addf %115, %116 : vector<8x256xf32>
    %118 = arith.negf %117 : vector<8x256xf32>
    %119 = math.exp %118 : vector<8x256xf32>
    %cst_33 = arith.constant 1.000000e+00 : f32
    %120 = vector.broadcast %cst_33 : f32 to vector<8x256xf32>
    %121 = arith.addf %120, %119 : vector<8x256xf32>
    %122 = arith.divf %120, %121 : vector<8x256xf32>
    %123 = vector.extract_strided_slice %112 {offsets = [0, 256], sizes = [8, 256], strides = [1, 1]} : vector<8x768xf32> to vector<8x256xf32>
    %124 = vector.extract_strided_slice %114 {offsets = [0, 256], sizes = [8, 256], strides = [1, 1]} : vector<8x768xf32> to vector<8x256xf32>
    %125 = arith.addf %123, %124 : vector<8x256xf32>
    %126 = arith.negf %125 : vector<8x256xf32>
    %127 = math.exp %126 : vector<8x256xf32>
    %cst_34 = arith.constant 1.000000e+00 : f32
    %128 = vector.broadcast %cst_34 : f32 to vector<8x256xf32>
    %129 = arith.addf %128, %127 : vector<8x256xf32>
    %130 = arith.divf %128, %129 : vector<8x256xf32>
    %131 = vector.extract_strided_slice %112 {offsets = [0, 512], sizes = [8, 256], strides = [1, 1]} : vector<8x768xf32> to vector<8x256xf32>
    %132 = vector.extract_strided_slice %114 {offsets = [0, 512], sizes = [8, 256], strides = [1, 1]} : vector<8x768xf32> to vector<8x256xf32>
    %133 = arith.addf %132, %14 : vector<8x256xf32>
    %134 = arith.mulf %122, %133 : vector<8x256xf32>
    %135 = arith.addf %131, %134 : vector<8x256xf32>
    %136 = math.tanh %135 : vector<8x256xf32>
    %137 = arith.subf %108, %136 : vector<8x256xf32>
    %138 = arith.mulf %130, %137 : vector<8x256xf32>
    %139 = arith.addf %136, %138 : vector<8x256xf32>
    %c4_i32 = arith.constant 4 : i32
    %c0_35 = arith.constant 0 : index
    %c0_36 = arith.constant 0 : index
    %140 = vector.load %arg12[%c0_35, %c0_36] : memref<8x256xf32, #tpu.memory_space<vmem>>, vector<8x256xf32>
    tpu.vector_store %arg12[%c0_35, %c0_36], %139 {strides = array<i32>} : memref<8x256xf32, #tpu.memory_space<vmem>>, vector<8x256xf32>,
    %c1_i32_37 = arith.constant 1 : i32
    %141 = arith.cmpi eq, %arg1, %c1_i32_37 : i32
    %142 = arith.extui %141 : i1 to i32
    %c0_i32_38 = arith.constant 0 : i32
    %143 = arith.cmpi ne, %142, %c0_i32_38 : i32
    scf.if %143 {
      %144 = arith.truncf %139 : vector<8x256xf32> to vector<8x256xbf16>
      %c0_39 = arith.constant 0 : index
      %c0_40 = arith.constant 0 : index
      %145 = vector.load %arg7[%c0_39, %c0_40] : memref<256x256xbf16, #tpu.memory_space<vmem>>, vector<256x256xbf16>
      %cst_41 = arith.constant dense<0.000000e+00> : vector<8x256xf32>
      %146 = tpu.matmul %144, %145, %cst_41 {dimension_numbers = #tpu.dot_dimension_numbers<[1], [0], [0], [1], [0, 0, 1, 1], [], []>} : vector<8x256xbf16>, vector<256x256xbf16>, vector<8x256xf32> -> vector<8x256xf32>
      %c0_42 = arith.constant 0 : index
      %c0_43 = arith.constant 0 : index
      %147 = vector.load %arg8[%c0_42, %c0_43] : memref<1x256xf32, #tpu.memory_space<vmem>>, vector<1x256xf32>
      %148 = vector.broadcast %147 : vector<1x256xf32> to vector<8x256xf32>
      %149 = arith.addf %146, %148 : vector<8x256xf32>
      %cst_44 = arith.constant 0.000000e+00 : f32
      %150 = vector.broadcast %cst_44 : f32 to vector<8x256xf32>
      %151 = arith.maximumf %149, %150 : vector<8x256xf32>
      %152 = arith.truncf %151 : vector<8x256xf32> to vector<8x256xbf16>
      %c0_45 = arith.constant 0 : index
      %c0_46 = arith.constant 0 : index
      %153 = vector.load %arg9[%c0_45, %c0_46] : memref<256x128xbf16, #tpu.memory_space<vmem>>, vector<256x128xbf16>
      %cst_47 = arith.constant dense<0.000000e+00> : vector<8x128xf32>
      %154 = tpu.matmul %152, %153, %cst_47 {dimension_numbers = #tpu.dot_dimension_numbers<[1], [0], [0], [1], [0, 0, 1, 1], [], []>} : vector<8x256xbf16>, vector<256x128xbf16>, vector<8x128xf32> -> vector<8x128xf32>
      %c0_48 = arith.constant 0 : index
      %c0_49 = arith.constant 0 : index
      %155 = vector.load %arg10[%c0_48, %c0_49] : memref<1x128xf32, #tpu.memory_space<vmem>>, vector<1x128xf32>
      %156 = vector.broadcast %155 : vector<1x128xf32> to vector<8x128xf32>
      %157 = arith.addf %154, %156 : vector<8x128xf32>
      %158 = vector.extract_strided_slice %157 {offsets = [0, 127], sizes = [8, 1], strides = [1, 1]} : vector<8x128xf32> to vector<8x1xf32>
      %cst_50 = arith.constant dense<0.000000e+00> : vector<8xf32>
      %159 = vector.multi_reduction <add>, %157, %cst_50 [1] : vector<8x128xf32> to vector<8xf32>
      %160 = vector.shape_cast %159 : vector<8xf32> to vector<8x1xf32>
      %161 = arith.subf %160, %158 : vector<8x1xf32>
      %cst_51 = arith.constant 2.500000e-01 : f32
      %162 = vector.broadcast %cst_51 : f32 to vector<8x1xf32>
      %163 = arith.mulf %161, %162 : vector<8x1xf32>
      %164 = vector.broadcast %163 : vector<8x1xf32> to vector<8x128xf32>
      %165 = arith.subf %157, %164 : vector<8x128xf32>
      %166 = vector.broadcast %158 : vector<8x1xf32> to vector<8x128xf32>
      %167 = arith.addf %166, %165 : vector<8x128xf32>
      %c0_52 = arith.constant 0 : index
      %c0_53 = arith.constant 0 : index
      %168 = vector.load %arg11[%c0_52, %c0_53] : memref<8x128xf32, #tpu.memory_space<vmem>>, vector<8x128xf32>
      tpu.vector_store %arg11[%c0_52, %c0_53], %167 {strides = array<i32>} : memref<8x128xf32, #tpu.memory_space<vmem>>, vector<8x128xf32>,
    } else {
    }
    return
  }
  func.func @transform_0(%arg0: i32, %arg1: i32) -> (i32, i32, i32) {
    %c0_i32 = arith.constant 0 : i32
    %c0_i32_0 = arith.constant 0 : i32
    return %arg0, %arg1, %c0_i32 : i32, i32, i32
  }
  func.func @transform_1(%arg0: i32, %arg1: i32) -> (i32, i32) {
    %c0_i32 = arith.constant 0 : i32
    %c0_i32_0 = arith.constant 0 : i32
    %c0_i32_1 = arith.constant 0 : i32
    return %c0_i32, %c0_i32_0 : i32, i32
  }
  func.func @transform_2(%arg0: i32, %arg1: i32) -> (i32, i32) {
    %c0_i32 = arith.constant 0 : i32
    %c0_i32_0 = arith.constant 0 : i32
    %c0_i32_1 = arith.constant 0 : i32
    return %c0_i32, %c0_i32_0 : i32, i32
  }
  func.func @transform_3(%arg0: i32, %arg1: i32) -> (i32, i32) {
    %c0_i32 = arith.constant 0 : i32
    %c0_i32_0 = arith.constant 0 : i32
    %c0_i32_1 = arith.constant 0 : i32
    return %c0_i32, %c0_i32_0 : i32, i32
  }
  func.func @transform_4(%arg0: i32, %arg1: i32) -> (i32, i32) {
    %c0_i32 = arith.constant 0 : i32
    %c0_i32_0 = arith.constant 0 : i32
    %c0_i32_1 = arith.constant 0 : i32
    return %c0_i32, %c0_i32_0 : i32, i32
  }
  func.func @transform_5(%arg0: i32, %arg1: i32) -> (i32, i32) {
    %c0_i32 = arith.constant 0 : i32
    %c0_i32_0 = arith.constant 0 : i32
    %c0_i32_1 = arith.constant 0 : i32
    return %c0_i32, %c0_i32_0 : i32, i32
  }
  func.func @transform_6(%arg0: i32, %arg1: i32) -> (i32, i32) {
    %c0_i32 = arith.constant 0 : i32
    %c0_i32_0 = arith.constant 0 : i32
    %c0_i32_1 = arith.constant 0 : i32
    return %c0_i32, %c0_i32_0 : i32, i32
  }
  func.func @transform_7(%arg0: i32, %arg1: i32) -> (i32, i32) {
    %c0_i32 = arith.constant 0 : i32
    %c0_i32_0 = arith.constant 0 : i32
    %c0_i32_1 = arith.constant 0 : i32
    return %c0_i32, %c0_i32_0 : i32, i32
  }
  func.func @transform_8(%arg0: i32, %arg1: i32) -> (i32, i32) {
    %c0_i32 = arith.constant 0 : i32
    %c0_i32_0 = arith.constant 0 : i32
    %c0_i32_1 = arith.constant 0 : i32
    return %c0_i32, %c0_i32_0 : i32, i32
  }
  func.func @transform_9(%arg0: i32, %arg1: i32) -> (i32, i32) {
    %c0_i32 = arith.constant 0 : i32
    %c0_i32_0 = arith.constant 0 : i32
    return %arg0, %c0_i32 : i32, i32
  }
}

</mosaic_0001>

<llo_original>
// kernel: duel_q_gru_forward.1
$region0: #{duel_q_gru_forward.1}
  #allocation0 [shape = 'u32[]', space=smem, size = 0x4, offset = 0x4, fixed_abs, tag = 'smem constant byte address 0x4 - core index']
  #allocation1 [shape = 'u32[144,128]{1,0:T(1,128)}', space=vmem, size = 0x12000, scoped, tag = 'internal scratch']
  #allocation2 [shape = 'f32[8,256]{1,0:T(8,128)}', space=vmem, size = 0x2000, scoped, tag = 'scratch operand']
  #allocation3 [shape = 'f32[32,768]{1,0:T(8,128)}', space=vmem, size = 0x18000, scoped, tag = 'scratch operand']
  %s0 = inlined_call_operand.vmem [shape: bf16[1,64,16], index: 0, kind: input, shape index: {}]
  %s1 = inlined_call_operand.vmem [shape: bf16[16,768], index: 1, kind: input, shape index: {}]
  %s2 = inlined_call_operand.vmem [shape: f32[1,768], index: 2, kind: input, shape index: {}]
  %s3 = inlined_call_operand.vmem [shape: bf16[256,768], index: 3, kind: input, shape index: {}]
  %s4 = inlined_call_operand.vmem [shape: f32[1,256], index: 4, kind: input, shape index: {}]
  %s5 = inlined_call_operand.vmem [shape: bf16[256,256], index: 5, kind: input, shape index: {}]
  %s6 = inlined_call_operand.vmem [shape: f32[1,256], index: 6, kind: input, shape index: {}]
  %s7 = inlined_call_operand.vmem [shape: bf16[256,128], index: 7, kind: input, shape index: {}]
  %s8 = inlined_call_operand.vmem [shape: f32[1,128], index: 8, kind: input, shape index: {}]
  %s9 = inlined_call_operand.vmem [shape: f32[8,128], index: 9, kind: output, shape index: {}]
  %s10 = sld [smem:[#allocation0]]
  $region77: #{duel_q_gru_forward.1} parent=0
    _
  %s12 = ssub.s32 1, %s10
  %s13 = scalar_select 0, %s12, %s10
  loop: start=0, step=1, limit=4
  $region2: #{duel_q_gru_forward.1} parent=0 // loop_pre_header
    _
  $region3: #{duel_q_gru_forward.1} parent=0 // loop_header
    %s15 = sphi 0, %s19
    %p16 = scmp.ge.s32.totalorder %s15, 4
    %s22 = sphi 0, %s34
    %s23 = sphi 0, %s30
    %s24 = sphi 0, %s22
    %s25 = sphi 0, %s23
    %s26 = sphi 0, %s24
    %s27 = sphi 0, %s25
    %s39 = sphi 0, %s41
    %s42 = sphi 0, %s39
    %s43 = sphi 0, %s42
    %s59 = sphi 0, %s43
    %s63 = sphi 0, %s63
    %s65 = sphi 0, %s63
    %s66 = sphi 0, %s65
    %s80 = sphi 0, %s66
    %s84 = sphi 0, %s84
    %s86 = sphi 0, %s84
    %s87 = sphi 0, %s86
    %s101 = sphi 0, %s87
    %s105 = sphi 0, %s105
    %s107 = sphi 0, %s105
    %s108 = sphi 0, %s107
    %s122 = sphi 0, %s108
    %s126 = sphi 0, %s126
    %s128 = sphi 0, %s126
    %s129 = sphi 0, %s128
    %s143 = sphi 0, %s129
    %s147 = sphi 0, %s147
    %s149 = sphi 0, %s147
    %s150 = sphi 0, %s149
    %s164 = sphi 0, %s150
    %s168 = sphi 0, %s168
    %s170 = sphi 0, %s168
    %s171 = sphi 0, %s170
    %s185 = sphi 0, %s171
    %s189 = sphi 0, %s189
    %s191 = sphi 0, %s189
    %s192 = sphi 0, %s191
    %s206 = sphi 0, %s192
    %s210 = sphi 0, %s210
    %s212 = sphi 0, %s210
    %s213 = sphi 0, %s212
    %s227 = sphi 0, %s213
    %s233 = sphi 0, %s235
    %s236 = sphi 0, %s233
    %s237 = sphi 0, %s236
    %s253 = sphi 0, %s237
  $region4: #{duel_q_gru_forward.1} parent=0 // loop_header_branch
    %18 = sbr.rel (%p16) target = $region8
  $region5: #{duel_q_gru_forward.1} parent=0 // loop_body
    %s20 = ssub.s32 %s15, 1
    %s21 = ssub.s32 %s15, 2
    %s28 = sadd.s32 1, %s23
    %p29 = scmp.ge.s32.totalorder %s28, 2
    %s30 = scalar_select %p29, 0, %s28
    %s31 = sadd.s32 1, %s22
    %s32 = scalar_select %p29, %s31, %s22
    %p33 = scmp.ge.s32.totalorder %s32, 1
    %s34 = scalar_select %p33, 0, %s32
    %s35 = ssub.s32 %s22, %s34
    %s36 = ssub.s32 %s23, %s30
    %s37 = sor.u32 %s35, %s36
    %p38 = scmp.eq.s32.totalorder %s37, 0
    %s40 = sadd.s32 %s39, 1
    %s41 = scalar_select %p38, %s39, %s40
    %p44 = pneg %p38
    %p45 = scmp.eq.s32.totalorder %s15, 1
    %p46 = por %p44, %p45
    %p47 = scmp.ne.s32.totalorder %s39, %s42
    %p48 = scmp.eq.s32.totalorder %s15, 0
    %p49 = por %p47, %p48
    %p50 = scmp.ne.s32.totalorder %s39, %s42
    %p51 = scmp.eq.s32.totalorder %s20, 1
    %p52 = por %p50, %p51
    %p53 = scmp.ne.s32.totalorder %s42, %s43
    %p54 = scmp.eq.s32.totalorder %s20, 0
    %p55 = por %p53, %p54
    %p56 = scmp.ne.s32.totalorder %s42, %s43
    %p57 = scmp.eq.s32.totalorder %s21, 1
    %p58 = por %p56, %p57
    %p60 = scmp.ne.s32.totalorder %s43, %s59
    %p61 = scmp.eq.s32.totalorder %s21, 0
    %p62 = por %p60, %p61
    %s64 = sadd.s32 %s63, 1
    %p67 = scmp.eq.s32.totalorder %s15, 1
    %p68 = scmp.ne.s32.totalorder %s63, %s65
    %p69 = scmp.eq.s32.totalorder %s15, 0
    %p70 = por %p68, %p69
    %p71 = scmp.ne.s32.totalorder %s63, %s65
    %p72 = scmp.eq.s32.totalorder %s20, 1
    %p73 = por %p71, %p72
    %p74 = scmp.ne.s32.totalorder %s65, %s66
    %p75 = scmp.eq.s32.totalorder %s20, 0
    %p76 = por %p74, %p75
    %p77 = scmp.ne.s32.totalorder %s65, %s66
    %p78 = scmp.eq.s32.totalorder %s21, 1
    %p79 = por %p77, %p78
    %p81 = scmp.ne.s32.totalorder %s66, %s80
    %p82 = scmp.eq.s32.totalorder %s21, 0
    %p83 = por %p81, %p82
    %s85 = sadd.s32 %s84, 1
    %p88 = scmp.eq.s32.totalorder %s15, 1
    %p89 = scmp.ne.s32.totalorder %s84, %s86
    %p90 = scmp.eq.s32.totalorder %s15, 0
    %p91 = por %p89, %p90
    %p92 = scmp.ne.s32.totalorder %s84, %s86
    %p93 = scmp.eq.s32.totalorder %s20, 1
    %p94 = por %p92, %p93
    %p95 = scmp.ne.s32.totalorder %s86, %s87
    %p96 = scmp.eq.s32.totalorder %s20, 0
    %p97 = por %p95, %p96
    %p98 = scmp.ne.s32.totalorder %s86, %s87
    %p99 = scmp.eq.s32.totalorder %s21, 1
    %p100 = por %p98, %p99
    %p102 = scmp.ne.s32.totalorder %s87, %s101
    %p103 = scmp.eq.s32.totalorder %s21, 0
    %p104 = por %p102, %p103
    %s106 = sadd.s32 %s105, 1
    %p109 = scmp.eq.s32.totalorder %s15, 1
    %p110 = scmp.ne.s32.totalorder %s105, %s107
    %p111 = scmp.eq.s32.totalorder %s15, 0
    %p112 = por %p110, %p111
    %p113 = scmp.ne.s32.totalorder %s105, %s107
    %p114 = scmp.eq.s32.totalorder %s20, 1
    %p115 = por %p113, %p114
    %p116 = scmp.ne.s32.totalorder %s107, %s108
    %p117 = scmp.eq.s32.totalorder %s20, 0
    %p118 = por %p116, %p117
    %p119 = scmp.ne.s32.totalorder %s107, %s108
    %p120 = scmp.eq.s32.totalorder %s21, 1
    %p121 = por %p119, %p120
    %p123 = scmp.ne.s32.totalorder %s108, %s122
    %p124 = scmp.eq.s32.totalorder %s21, 0
    %p125 = por %p123, %p124
    %s127 = sadd.s32 %s126, 1
    %p130 = scmp.eq.s32.totalorder %s15, 1
    %p131 = scmp.ne.s32.totalorder %s126, %s128
    %p132 = scmp.eq.s32.totalorder %s15, 0
    %p133 = por %p131, %p132
    %p134 = scmp.ne.s32.totalorder %s126, %s128
    %p135 = scmp.eq.s32.totalorder %s20, 1
    %p136 = por %p134, %p135
    %p137 = scmp.ne.s32.totalorder %s128, %s129
    %p138 = scmp.eq.s32.totalorder %s20, 0
    %p139 = por %p137, %p138
    %p140 = scmp.ne.s32.totalorder %s128, %s129
    %p141 = scmp.eq.s32.totalorder %s21, 1
    %p142 = por %p140, %p141
    %p144 = scmp.ne.s32.totalorder %s129, %s143
    %p145 = scmp.eq.s32.totalorder %s21, 0
    %p146 = por %p144, %p145
    %s148 = sadd.s32 %s147, 1
    %p151 = scmp.eq.s32.totalorder %s15, 1
    %p152 = scmp.ne.s32.totalorder %s147, %s149
    %p153 = scmp.eq.s32.totalorder %s15, 0
    %p154 = por %p152, %p153
    %p155 = scmp.ne.s32.totalorder %s147, %s149
    %p156 = scmp.eq.s32.totalorder %s20, 1
    %p157 = por %p155, %p156
    %p158 = scmp.ne.s32.totalorder %s149, %s150
    %p159 = scmp.eq.s32.totalorder %s20, 0
    %p160 = por %p158, %p159
    %p161 = scmp.ne.s32.totalorder %s149, %s150
    %p162 = scmp.eq.s32.totalorder %s21, 1
    %p163 = por %p161, %p162
    %p165 = scmp.ne.s32.totalorder %s150, %s164
    %p166 = scmp.eq.s32.totalorder %s21, 0
    %p167 = por %p165, %p166
    %s169 = sadd.s32 %s168, 1
    %p172 = scmp.eq.s32.totalorder %s15, 1
    %p173 = scmp.ne.s32.totalorder %s168, %s170
    %p174 = scmp.eq.s32.totalorder %s15, 0
    %p175 = por %p173, %p174
    %p176 = scmp.ne.s32.totalorder %s168, %s170
    %p177 = scmp.eq.s32.totalorder %s20, 1
    %p178 = por %p176, %p177
    %p179 = scmp.ne.s32.totalorder %s170, %s171
    %p180 = scmp.eq.s32.totalorder %s20, 0
    %p181 = por %p179, %p180
    %p182 = scmp.ne.s32.totalorder %s170, %s171
    %p183 = scmp.eq.s32.totalorder %s21, 1
    %p184 = por %p182, %p183
    %p186 = scmp.ne.s32.totalorder %s171, %s185
    %p187 = scmp.eq.s32.totalorder %s21, 0
    %p188 = por %p186, %p187
    %s190 = sadd.s32 %s189, 1
    %p193 = scmp.eq.s32.totalorder %s15, 1
    %p194 = scmp.ne.s32.totalorder %s189, %s191
    %p195 = scmp.eq.s32.totalorder %s15, 0
    %p196 = por %p194, %p195
    %p197 = scmp.ne.s32.totalorder %s189, %s191
    %p198 = scmp.eq.s32.totalorder %s20, 1
    %p199 = por %p197, %p198
    %p200 = scmp.ne.s32.totalorder %s191, %s192
    %p201 = scmp.eq.s32.totalorder %s20, 0
    %p202 = por %p200, %p201
    %p203 = scmp.ne.s32.totalorder %s191, %s192
    %p204 = scmp.eq.s32.totalorder %s21, 1
    %p205 = por %p203, %p204
    %p207 = scmp.ne.s32.totalorder %s192, %s206
    %p208 = scmp.eq.s32.totalorder %s21, 0
    %p209 = por %p207, %p208
    %s211 = sadd.s32 %s210, 1
    %p214 = scmp.eq.s32.totalorder %s15, 1
    %p215 = scmp.ne.s32.totalorder %s210, %s212
    %p216 = scmp.eq.s32.totalorder %s15, 0
    %p217 = por %p215, %p216
    %p218 = scmp.ne.s32.totalorder %s210, %s212
    %p219 = scmp.eq.s32.totalorder %s20, 1
    %p220 = por %p218, %p219
    %p221 = scmp.ne.s32.totalorder %s212, %s213
    %p222 = scmp.eq.s32.totalorder %s20, 0
    %p223 = por %p221, %p222
    %p224 = scmp.ne.s32.totalorder %s212, %s213
    %p225 = scmp.eq.s32.totalorder %s21, 1
    %p226 = por %p224, %p225
    %p228 = scmp.ne.s32.totalorder %s213, %s227
    %p229 = scmp.eq.s32.totalorder %s21, 0
    %p230 = por %p228, %p229
    %s231 = ssub.s32 %s22, %s34
    %p232 = scmp.eq.s32.totalorder %s231, 0
    %s234 = sadd.s32 %s233, 1
    %s235 = scalar_select %p232, %s233, %s234
    %p238 = pneg %p232
    %p239 = scmp.eq.s32.totalorder %s15, 1
    %p240 = por %p238, %p239
    %p241 = scmp.ne.s32.totalorder %s233, %s236
    %p242 = scmp.eq.s32.totalorder %s15, 0
    %p243 = por %p241, %p242
    %p244 = scmp.ne.s32.totalorder %s233, %s236
    %p245 = scmp.eq.s32.totalorder %s20, 1
    %p246 = por %p244, %p245
    %p247 = scmp.ne.s32.totalorder %s236, %s237
    %p248 = scmp.eq.s32.totalorder %s20, 0
    %p249 = por %p247, %p248
    %p250 = scmp.ne.s32.totalorder %s236, %s237
    %p251 = scmp.eq.s32.totalorder %s21, 1
    %p252 = por %p250, %p251
    %p254 = scmp.ne.s32.totalorder %s237, %s253
    %p255 = scmp.eq.s32.totalorder %s21, 0
    %p256 = por %p254, %p255
    %p257 = scmp.le.s32.totalorder 1, %s15
    %p258 = scmp.lt.s32.totalorder %s15, 3
    %p259 = pnand %p257, %p258
    %p260 = pneg %p259
    // Predicated region
    $region9: #{duel_q_gru_forward.1} parent=5 // pred_check
      _
    $region10: #{duel_q_gru_forward.1} parent=5 // pred_check_branch
      %262 = sbr.rel (%p259) target = $region12
    $region11: #{duel_q_gru_forward.1} parent=5 // pred_region
      %s263 = ssub.s32 %s15, 1
      // Predicated region
      $region13: #{duel_q_gru_forward.1} parent=11 // pred_check
        %p264 = pneg %p76
      $region14: #{duel_q_gru_forward.1} parent=11 // pred_check_branch
        %266 = sbr.rel (%p264) target = $region16
      $region15: #{duel_q_gru_forward.1} parent=11 // pred_region
        _
      $region16: #{duel_q_gru_forward.1} parent=11 // pred_fallthru
        _
      // Predicated region
      $region17: #{duel_q_gru_forward.1} parent=11 // pred_check
        %p267 = pneg %p97
      $region18: #{duel_q_gru_forward.1} parent=11 // pred_check_branch
        %269 = sbr.rel (%p267) target = $region20
      $region19: #{duel_q_gru_forward.1} parent=11 // pred_region
        _
      $region20: #{duel_q_gru_forward.1} parent=11 // pred_fallthru
        _
      // Predicated region
      $region21: #{duel_q_gru_forward.1} parent=11 // pred_check
        %p270 = pneg %p118
      $region22: #{duel_q_gru_forward.1} parent=11 // pred_check_branch
        %272 = sbr.rel (%p270) target = $region24
      $region23: #{duel_q_gru_forward.1} parent=11 // pred_region
        _
      $region24: #{duel_q_gru_forward.1} parent=11 // pred_fallthru
        _
      // Predicated region
      $region25: #{duel_q_gru_forward.1} parent=11 // pred_check
        %p273 = pneg %p139
      $region26: #{duel_q_gru_forward.1} parent=11 // pred_check_branch
        %275 = sbr.rel (%p273) target = $region28
      $region27: #{duel_q_gru_forward.1} parent=11 // pred_region
        _
      $region28: #{duel_q_gru_forward.1} parent=11 // pred_fallthru
        _
      // Predicated region
      $region29: #{duel_q_gru_forward.1} parent=11 // pred_check
        %p276 = pneg %p160
      $region30: #{duel_q_gru_forward.1} parent=11 // pred_check_branch
        %278 = sbr.rel (%p276) target = $region32
      $region31: #{duel_q_gru_forward.1} parent=11 // pred_region
        _
      $region32: #{duel_q_gru_forward.1} parent=11 // pred_fallthru
        _
      // Predicated region
      $region33: #{duel_q_gru_forward.1} parent=11 // pred_check
        %p279 = pneg %p181
      $region34: #{duel_q_gru_forward.1} parent=11 // pred_check_branch
        %281 = sbr.rel (%p279) target = $region36
      $region35: #{duel_q_gru_forward.1} parent=11 // pred_region
        _
      $region36: #{duel_q_gru_forward.1} parent=11 // pred_fallthru
        _
      // Predicated region
      $region37: #{duel_q_gru_forward.1} parent=11 // pred_check
        %p282 = pneg %p202
      $region38: #{duel_q_gru_forward.1} parent=11 // pred_check_branch
        %284 = sbr.rel (%p282) target = $region40
      $region39: #{duel_q_gru_forward.1} parent=11 // pred_region
        _
      $region40: #{duel_q_gru_forward.1} parent=11 // pred_fallthru
        _
      // Predicated region
      $region41: #{duel_q_gru_forward.1} parent=11 // pred_check
        %p285 = pneg %p223
      $region42: #{duel_q_gru_forward.1} parent=11 // pred_check_branch
        %287 = sbr.rel (%p285) target = $region44
      $region43: #{duel_q_gru_forward.1} parent=11 // pred_region
        _
      $region44: #{duel_q_gru_forward.1} parent=11 // pred_fallthru
        _
    $region12: #{duel_q_gru_forward.1} parent=5 // pred_fallthru
      _
    %p288 = scmp.lt.s32.totalorder %s15, 2
    // Predicated region
    $region45: #{duel_q_gru_forward.1} parent=5 // pred_check
      %p289 = pneg %p288
    $region46: #{duel_q_gru_forward.1} parent=5 // pred_check_branch
      %291 = sbr.rel (%p289) target = $region48
    $region47: #{duel_q_gru_forward.1} parent=5 // pred_region
      // Predicated region
      $region49: #{duel_q_gru_forward.1} parent=47 // pred_check
        %p292 = pneg %p49
      $region50: #{duel_q_gru_forward.1} parent=47 // pred_check_branch
        %294 = sbr.rel (%p292) target = $region52
      $region51: #{duel_q_gru_forward.1} parent=47 // pred_region
        %s295 = smul.u32 4, %s23
        %p296 = scmp.lt.s32.totalorder %s22, 0
        %s297 = scalar_select %p296, %s22, 0
        %p298 = scmp.lt.s32.totalorder %s295, 7
        %s299 = scalar_select %p298, %s295, 7
        %s300 = smul.addr %s297, 8
        %s301 = sadd.s32 %s299, %s300
        %s302 = smul.addr %s301, 4
        %s303 = scalar_lea.vmem %s0, %s302
        %s304 = smul.u32 4, %s23
      $region52: #{duel_q_gru_forward.1} parent=47 // pred_fallthru
        _
    $region48: #{duel_q_gru_forward.1} parent=5 // pred_fallthru
      _
    %p305 = scmp.le.s32.totalorder 1, %s15
    %p306 = scmp.lt.s32.totalorder %s15, 3
    %p307 = pnand %p305, %p306
    %p308 = pneg %p307
    // Predicated region
    $region53: #{duel_q_gru_forward.1} parent=5 // pred_check
      _
    $region54: #{duel_q_gru_forward.1} parent=5 // pred_check_branch
      %310 = sbr.rel (%p307) target = $region56
    $region55: #{duel_q_gru_forward.1} parent=5 // pred_region
      %s311 = ssub.s32 %s15, 1
      %s312 = smul.u32 4, %s25
      %p313 = scmp.lt.s32.totalorder %s24, 0
      %s314 = scalar_select %p313, %s24, 0
      %p315 = scmp.lt.s32.totalorder %s312, 7
      %s316 = scalar_select %p315, %s312, 7
      %s317 = smul.addr %s314, 8
      %s318 = sadd.s32 %s316, %s317
      %s319 = smul.addr %s318, 4
      %s320 = scalar_lea.vmem %s0, %s319
      %p321 = pneg %p55
      %p322 = pneg %p52
      %p323 = pneg %p76
      %p324 = pneg %p73
      %p325 = pneg %p97
      %p326 = pneg %p94
      %p327 = pneg %p118
      %p328 = pneg %p115
      %p329 = pneg %p139
      %p330 = pneg %p136
      %p331 = pneg %p160
      %p332 = pneg %p157
      %p333 = pneg %p181
      %p334 = pneg %p178
      %p335 = pneg %p202
      %p336 = pneg %p199
      %p337 = pneg %p223
      %p338 = pneg %p220
      %p339 = pneg %p249
      %p340 = pneg %p246
      %p341 = scmp.lt.s32.totalorder %s24, 0
      %s342 = scalar_select %p341, %s24, 0
      %s343 = smul.addr %s342, 8
      %s344 = scalar_lea.vmem %s9, %s343
      %s345 = smul.u32 4, %s25
      %p346 = scmp.lt.s32.totalorder %s24, 0
      %s347 = scalar_select %p346, %s24, 0
      %p348 = scmp.lt.s32.totalorder %s345, 7
      %s349 = scalar_select %p348, %s345, 7
      %s350 = smul.addr %s347, 8
      %s351 = sadd.s32 %s349, %s350
      %s352 = smul.addr %s351, 4
      %s353 = scalar_lea.vmem %s0, %s352
      %s354 = smul.u32 4, %s25
      %p355 = scmp.lt.s32.totalorder %s24, 0
      %s356 = scalar_select %p355, %s24, 0
      %s357 = smul.addr %s356, 8
      %s358 = scalar_lea.vmem %s9, %s357
      %p360 = scmp.eq.s32.totalorder %s25, 0
      // Predicated region
      $region57: #{duel_q_gru_forward.1} parent=55 // pred_check
        %p361 = pneg %p360
      $region58: #{duel_q_gru_forward.1} parent=55 // pred_check_branch
        %363 = sbr.rel (%p361) target = $region60
      $region59: #{duel_q_gru_forward.1} parent=55 // pred_region
        %364 = vst [vmem:[#allocation2] sm:$0xff] 0.0
        %365 = vst [vmem:[#allocation2 + $0x8] sm:$0xff] 0.0
      $region60: #{duel_q_gru_forward.1} parent=55 // pred_fallthru
        _
      %v366 = vld [vmem:[%s353] sm:$0xf]
      %v367 = vld [vmem:[%s353 + $0x4] sm:$0xf]
      %v368 = vld [vmem:[%s353 + $0x8] sm:$0xf]
      %v369 = vld [vmem:[%s353 + $0xc] sm:$0xf]
      %v370 = vld [vmem:[%s1] sm:$0xff]
      %v371 = vld [vmem:[%s1 + $0x8] sm:$0xff]
      %v372 = vld [vmem:[%s1 + $0x10] sm:$0xff]
      %v373 = vld [vmem:[%s1 + $0x18] sm:$0xff]
      %v374 = vld [vmem:[%s1 + $0x20] sm:$0xff]
      %v375 = vld [vmem:[%s1 + $0x28] sm:$0xff]
      %v376 = vld [vmem:[%s2] sm:$0x3f]
      %v378 = vlaneseq
      %v379 = vshrl.u32 %v378, 7
      %v380 = vsub.s32 0, %v379
      %v381 = vrot.slane %v376, %v380
      %v382 = vlaneseq
      %v383 = vshrl.u32 %v382, 7
      %v384 = vsub.s32 1, %v383
      %v385 = vrot.slane %v376, %v384
      %v386 = vlaneseq
      %v387 = vshrl.u32 %v386, 7
      %v388 = vsub.s32 2, %v387
      %v389 = vrot.slane %v376, %v388
      %v390 = vlaneseq
      %v391 = vshrl.u32 %v390, 7
      %v392 = vsub.s32 3, %v391
      %v393 = vrot.slane %v376, %v392
      %v394 = vlaneseq
      %v395 = vshrl.u32 %v394, 7
      %v396 = vsub.s32 4, %v395
      %v397 = vrot.slane %v376, %v396
      %v398 = vlaneseq
      %v399 = vshrl.u32 %v398, 7
      %v400 = vsub.s32 5, %v399
      %v401 = vrot.slane %v376, %v400
      %v412 = vunpack.c.l.b16 %v366
      %v413 = vunpack.c.l.b16 %v367
      %v414 = vunpack.c.l.b16 %v368
      %v415 = vunpack.c.l.b16 %v369
      %v416 = vpack.c.b16 %v413, %v412
      %v417 = vpack.c.b16 %v415, %v414
      %v424 = vunpack.c.l.b16 %v370
      %v425 = vunpack.c.h.b16 %v370
      %v426 = vunpack.c.l.b16 %v371
      %v427 = vunpack.c.h.b16 %v371
      %v428 = vunpack.c.l.b16 %v372
      %v429 = vunpack.c.h.b16 %v372
      %v430 = vunpack.c.l.b16 %v373
      %v431 = vunpack.c.h.b16 %v373
      %v432 = vunpack.c.l.b16 %v374
      %v433 = vunpack.c.h.b16 %v374
      %v434 = vunpack.c.l.b16 %v375
      %v435 = vunpack.c.h.b16 %v375
      %v436 = vpack.c.b16 %v430, %v424
      %v437 = vpack.c.b16 %v431, %v425
      %v438 = vpack.c.b16 %v432, %v426
      %v439 = vpack.c.b16 %v433, %v427
      %v440 = vpack.c.b16 %v434, %v428
      %v441 = vpack.c.b16 %v435, %v429
      %vm448 = vcmask 130048
      %v450 = vsel %vm448, %v416, 0
      %v453 = vsel %vm448, %v417, 0
      %455 = vmatprep.subr.bf16.mxu0 %v437
      %456 = vmatpush1.bf16.msra.mxu0 %v436
      %457 = vmatprep.subr.bf16.mxu0 0
      %458 = vmatpush1.bf16.msra.mxu0 0
      %459 = vmatprep.subr.bf16.mxu0 0
      %460 = vmatpush1.bf16.msra.mxu0 0
      %461 = vmatprep.subr.bf16.mxu0 0
      %462 = vmatpush1.bf16.msra.mxu0 0
      %463 = vmatprep.subr.bf16.mxu0 0
      %464 = vmatpush1.bf16.msra.mxu0 0
      %465 = vmatprep.subr.bf16.mxu0 0
      %466 = vmatpush1.bf16.msra.mxu0 0
      %467 = vmatprep.subr.bf16.mxu0 0
      %468 = vmatpush1.bf16.msra.mxu0 0
      %469 = vmatprep.subr.bf16.mxu0 0
      %470 = vmatpush1.bf16.msra.mxu0 0
      %471 = vmatprep.subr.bf16.mxu0 0
      %472 = vmatpush1.bf16.msra.mxu0 0
      %473 = vmatprep.subr.bf16.mxu0 0
      %474 = vmatpush1.bf16.msra.mxu0 0
      %475 = vmatprep.subr.bf16.mxu0 0
      %476 = vmatpush1.bf16.msra.mxu0 0
      %477 = vmatprep.subr.bf16.mxu0 0
      %478 = vmatpush1.bf16.msra.mxu0 0
      %479 = vmatprep.subr.bf16.mxu0 0
      %480 = vmatpush1.bf16.msra.mxu0 0
      %481 = vmatprep.subr.bf16.mxu0 0
      %482 = vmatpush1.bf16.msra.mxu0 0
      %483 = vmatprep.subr.bf16.mxu0 0
      %484 = vmatpush1.bf16.msra.mxu0 0
      %485 = vmatprep.subr.bf16.mxu0 0
      %486 = vmatpush1.bf16.msra.mxu0 0
      %487 = vmatprep.mubr.bf16.mxu0 0
      %488 = vmatmul.mubr.bf16.gmra.mrb[0].mxu0 %v450
      %v489 = vpop.f32.mrb[0].mxu0
      %v490 = vadd.f32 %v381, %v489
      %v491 = vpop.f32.mrb[0].mxu0
      %v492 = vadd.f32 %v385, %v491
      %v493 = vpop.f32.mrb[0].mxu0
      %v494 = vadd.f32 %v381, %v493
      %v495 = vpop.f32.mrb[0].mxu0
      %v496 = vadd.f32 %v385, %v495
      %497 = vmatprep.mubr.bf16.mxu0 0
      %498 = vmatmul.mubr.bf16.gmra.mrb[0].mxu0 %v453
      %v499 = vpop.f32.mrb[0].mxu0
      %v500 = vadd.f32 %v381, %v499
      %v501 = vpop.f32.mrb[0].mxu0
      %v502 = vadd.f32 %v385, %v501
      %v503 = vpop.f32.mrb[0].mxu0
      %v504 = vadd.f32 %v381, %v503
      %v505 = vpop.f32.mrb[0].mxu0
      %v506 = vadd.f32 %v385, %v505
      %507 = vdwg.mxu0
      %508 = vmatprep.subr.bf16.mxu0 %v439
      %509 = vmatpush1.bf16.msra.mxu0 %v438
      %510 = vmatprep.subr.bf16.mxu0 0
      %511 = vmatpush1.bf16.msra.mxu0 0
      %512 = vmatprep.subr.bf16.mxu0 0
      %513 = vmatpush1.bf16.msra.mxu0 0
      %514 = vmatprep.subr.bf16.mxu0 0
      %515 = vmatpush1.bf16.msra.mxu0 0
      %516 = vmatprep.subr.bf16.mxu0 0
      %517 = vmatpush1.bf16.msra.mxu0 0
      %518 = vmatprep.subr.bf16.mxu0 0
      %519 = vmatpush1.bf16.msra.mxu0 0
      %520 = vmatprep.subr.bf16.mxu0 0
      %521 = vmatpush1.bf16.msra.mxu0 0
      %522 = vmatprep.subr.bf16.mxu0 0
      %523 = vmatpush1.bf16.msra.mxu0 0
      %524 = vmatprep.subr.bf16.mxu0 0
      %525 = vmatpush1.bf16.msra.mxu0 0
      %526 = vmatprep.subr.bf16.mxu0 0
      %527 = vmatpush1.bf16.msra.mxu0 0
      %528 = vmatprep.subr.bf16.mxu0 0
      %529 = vmatpush1.bf16.msra.mxu0 0
      %530 = vmatprep.subr.bf16.mxu0 0
      %531 = vmatpush1.bf16.msra.mxu0 0
      %532 = vmatprep.subr.bf16.mxu0 0
      %533 = vmatpush1.bf16.msra.mxu0 0
      %534 = vmatprep.subr.bf16.mxu0 0
      %535 = vmatpush1.bf16.msra.mxu0 0
      %536 = vmatprep.subr.bf16.mxu0 0
      %537 = vmatpush1.bf16.msra.mxu0 0
      %538 = vmatprep.subr.bf16.mxu0 0
      %539 = vmatpush1.bf16.msra.mxu0 0
      %540 = vmatprep.mubr.bf16.mxu0 0
      %541 = vmatmul.mubr.bf16.gmra.mrb[0].mxu0 %v450
      %v542 = vpop.f32.mrb[0].mxu0
      %v543 = vadd.f32 %v389, %v542
      %v544 = vpop.f32.mrb[0].mxu0
      %v545 = vadd.f32 %v393, %v544
      %v546 = vpop.f32.mrb[0].mxu0
      %v547 = vadd.f32 %v389, %v546
      %v548 = vpop.f32.mrb[0].mxu0
      %v549 = vadd.f32 %v393, %v548
      %550 = vmatprep.mubr.bf16.mxu0 0
      %551 = vmatmul.mubr.bf16.gmra.mrb[0].mxu0 %v453
      %v552 = vpop.f32.mrb[0].mxu0
      %v553 = vadd.f32 %v389, %v552
      %v554 = vpop.f32.mrb[0].mxu0
      %v555 = vadd.f32 %v393, %v554
      %v556 = vpop.f32.mrb[0].mxu0
      %v557 = vadd.f32 %v389, %v556
      %v558 = vpop.f32.mrb[0].mxu0
      %v559 = vadd.f32 %v393, %v558
      %560 = vdwg.mxu0
      %561 = vmatprep.subr.bf16.mxu0 %v441
      %562 = vmatpush1.bf16.msra.mxu0 %v440
      %563 = vmatprep.subr.bf16.mxu0 0
      %564 = vmatpush1.bf16.msra.mxu0 0
      %565 = vmatprep.subr.bf16.mxu0 0
      %566 = vmatpush1.bf16.msra.mxu0 0
      %567 = vmatprep.subr.bf16.mxu0 0
      %568 = vmatpush1.bf16.msra.mxu0 0
      %569 = vmatprep.subr.bf16.mxu0 0
      %570 = vmatpush1.bf16.msra.mxu0 0
      %571 = vmatprep.subr.bf16.mxu0 0
      %572 = vmatpush1.bf16.msra.mxu0 0
      %573 = vmatprep.subr.bf16.mxu0 0
      %574 = vmatpush1.bf16.msra.mxu0 0
      %575 = vmatprep.subr.bf16.mxu0 0
      %576 = vmatpush1.bf16.msra.mxu0 0
      %577 = vmatprep.subr.bf16.mxu0 0
      %578 = vmatpush1.bf16.msra.mxu0 0
      %579 = vmatprep.subr.bf16.mxu0 0
      %580 = vmatpush1.bf16.msra.mxu0 0
      %581 = vmatprep.subr.bf16.mxu0 0
      %582 = vmatpush1.bf16.msra.mxu0 0
      %583 = vmatprep.subr.bf16.mxu0 0
      %584 = vmatpush1.bf16.msra.mxu0 0
      %585 = vmatprep.subr.bf16.mxu0 0
      %586 = vmatpush1.bf16.msra.mxu0 0
      %587 = vmatprep.subr.bf16.mxu0 0
      %588 = vmatpush1.bf16.msra.mxu0 0
      %589 = vmatprep.subr.bf16.mxu0 0
      %590 = vmatpush1.bf16.msra.mxu0 0
      %591 = vmatprep.subr.bf16.mxu0 0
      %592 = vmatpush1.bf16.msra.mxu0 0
      %593 = vmatprep.mubr.bf16.mxu0 0
      %594 = vmatmul.mubr.bf16.gmra.mrb[0].mxu0 %v450
      %v595 = vpop.f32.mrb[0].mxu0
      %v596 = vadd.f32 %v397, %v595
      %v597 = vpop.f32.mrb[0].mxu0
      %v598 = vadd.f32 %v401, %v597
      %v599 = vpop.f32.mrb[0].mxu0
      %v600 = vadd.f32 %v397, %v599
      %v601 = vpop.f32.mrb[0].mxu0
      %v602 = vadd.f32 %v401, %v601
      %603 = vmatprep.mubr.bf16.mxu0 0
      %604 = vmatmul.mubr.bf16.gmra.mrb[0].mxu0 %v453
      %v605 = vpop.f32.mrb[0].mxu0
      %v606 = vadd.f32 %v397, %v605
      %v607 = vpop.f32.mrb[0].mxu0
      %v608 = vadd.f32 %v401, %v607
      %v609 = vpop.f32.mrb[0].mxu0
      %v610 = vadd.f32 %v397, %v609
      %v611 = vpop.f32.mrb[0].mxu0
      %v612 = vadd.f32 %v401, %v611
      %613 = vdwg.mxu0
      %614 = vst [vmem:[#allocation3] sm:$0xff] %v490
      %615 = vst [vmem:[#allocation3 + $0x8] sm:$0xff] %v492
      %616 = vst [vmem:[#allocation3 + $0x10] sm:$0xff] %v543
      %617 = vst [vmem:[#allocation3 + $0x18] sm:$0xff] %v545
      %618 = vst [vmem:[#allocation3 + $0x20] sm:$0xff] %v596
      %619 = vst [vmem:[#allocation3 + $0x28] sm:$0xff] %v598
      %620 = vst [vmem:[#allocation3 + $0x30] sm:$0xff] %v494
      %621 = vst [vmem:[#allocation3 + $0x38] sm:$0xff] %v496
      %622 = vst [vmem:[#allocation3 + $0x40] sm:$0xff] %v547
      %623 = vst [vmem:[#allocation3 + $0x48] sm:$0xff] %v549
      %624 = vst [vmem:[#allocation3 + $0x50] sm:$0xff] %v600
      %625 = vst [vmem:[#allocation3 + $0x58] sm:$0xff] %v602
      %626 = vst [vmem:[#allocation3 + $0x60] sm:$0xff] %v500
      %627 = vst [vmem:[#allocation3 + $0x68] sm:$0xff] %v502
      %628 = vst [vmem:[#allocation3 + $0x70] sm:$0xff] %v553
      %629 = vst [vmem:[#allocation3 + $0x78] sm:$0xff] %v555
      %630 = vst [vmem:[#allocation3 + $0x80] sm:$0xff] %v606
      %631 = vst [vmem:[#allocation3 + $0x88] sm:$0xff] %v608
      %632 = vst [vmem:[#allocation3 + $0x90] sm:$0xff] %v504
      %633 = vst [vmem:[#allocation3 + $0x98] sm:$0xff] %v506
      %634 = vst [vmem:[#allocation3 + $0xa0] sm:$0xff] %v557
      %635 = vst [vmem:[#allocation3 + $0xa8] sm:$0xff] %v559
      %636 = vst [vmem:[#allocation3 + $0xb0] sm:$0xff] %v610
      %637 = vst [vmem:[#allocation3 + $0xb8] sm:$0xff] %v612
      %v638 = vld [vmem:[%s3] sm:$0xff]
      %v639 = vld [vmem:[%s3 + $0x8] sm:$0xff]
      %v640 = vld [vmem:[%s3 + $0x10] sm:$0xff]
      %v641 = vld [vmem:[%s3 + $0x18] sm:$0xff]
      %v642 = vld [vmem:[%s3 + $0x20] sm:$0xff]
      %v643 = vld [vmem:[%s3 + $0x28] sm:$0xff]
      %v644 = vld [vmem:[%s3 + $0x30] sm:$0xff]
      %v645 = vld [vmem:[%s3 + $0x38] sm:$0xff]
      %v646 = vld [vmem:[%s3 + $0x40] sm:$0xff]
      %v647 = vld [vmem:[%s3 + $0x48] sm:$0xff]
      %v648 = vld [vmem:[%s3 + $0x50] sm:$0xff]
      %v649 = vld [vmem:[%s3 + $0x58] sm:$0xff]
      %v650 = vld [vmem:[%s3 + $0x60] sm:$0xff]
      %v651 = vld [vmem:[%s3 + $0x68] sm:$0xff]
      %v652 = vld [vmem:[%s3 + $0x70] sm:$0xff]
      %v653 = vld [vmem:[%s3 + $0x78] sm:$0xff]
      %v654 = vld [vmem:[%s3 + $0x80] sm:$0xff]
      %v655 = vld [vmem:[%s3 + $0x88] sm:$0xff]
      %v656 = vld [vmem:[%s3 + $0x90] sm:$0xff]
      %v657 = vld [vmem:[%s3 + $0x98] sm:$0xff]
      %v658 = vld [vmem:[%s3 + $0xa0] sm:$0xff]
      %v659 = vld [vmem:[%s3 + $0xa8] sm:$0xff]
      %v660 = vld [vmem:[%s3 + $0xb0] sm:$0xff]
      %v661 = vld [vmem:[%s3 + $0xb8] sm:$0xff]
      %v662 = vld [vmem:[%s3 + $0xc0] sm:$0xff]
      %v663 = vld [vmem:[%s3 + $0xc8] sm:$0xff]
      %v664 = vld [vmem:[%s3 + $0xd0] sm:$0xff]
      %v665 = vld [vmem:[%s3 + $0xd8] sm:$0xff]
      %v666 = vld [vmem:[%s3 + $0xe0] sm:$0xff]
      %v667 = vld [vmem:[%s3 + $0xe8] sm:$0xff]
      %v668 = vld [vmem:[%s3 + $0xf0] sm:$0xff]
      %v669 = vld [vmem:[%s3 + $0xf8] sm:$0xff]
      %v670 = vld [vmem:[%s3 + $0x100] sm:$0xff]
      %v671 = vld [vmem:[%s3 + $0x108] sm:$0xff]
      %v672 = vld [vmem:[%s3 + $0x110] sm:$0xff]
      %v673 = vld [vmem:[%s3 + $0x118] sm:$0xff]
      %v674 = vld [vmem:[%s3 + $0x120] sm:$0xff]
      %v675 = vld [vmem:[%s3 + $0x128] sm:$0xff]
      %v676 = vld [vmem:[%s3 + $0x130] sm:$0xff]
      %v677 = vld [vmem:[%s3 + $0x138] sm:$0xff]
      %v678 = vld [vmem:[%s3 + $0x140] sm:$0xff]
      %v679 = vld [vmem:[%s3 + $0x148] sm:$0xff]
      %v680 = vld [vmem:[%s3 + $0x150] sm:$0xff]
      %v681 = vld [vmem:[%s3 + $0x158] sm:$0xff]
      %v682 = vld [vmem:[%s3 + $0x160] sm:$0xff]
      %v683 = vld [vmem:[%s3 + $0x168] sm:$0xff]
      %v684 = vld [vmem:[%s3 + $0x170] sm:$0xff]
      %v685 = vld [vmem:[%s3 + $0x178] sm:$0xff]
      %v686 = vld [vmem:[%s3 + $0x180] sm:$0xff]
      %v687 = vld [vmem:[%s3 + $0x188] sm:$0xff]
      %v688 = vld [vmem:[%s3 + $0x190] sm:$0xff]
      %v689 = vld [vmem:[%s3 + $0x198] sm:$0xff]
      %v690 = vld [vmem:[%s3 + $0x1a0] sm:$0xff]
      %v691 = vld [vmem:[%s3 + $0x1a8] sm:$0xff]
      %v692 = vld [vmem:[%s3 + $0x1b0] sm:$0xff]
      %v693 = vld [vmem:[%s3 + $0x1b8] sm:$0xff]
      %v694 = vld [vmem:[%s3 + $0x1c0] sm:$0xff]
      %v695 = vld [vmem:[%s3 + $0x1c8] sm:$0xff]
      %v696 = vld [vmem:[%s3 + $0x1d0] sm:$0xff]
      %v697 = vld [vmem:[%s3 + $0x1d8] sm:$0xff]
      %v698 = vld [vmem:[%s3 + $0x1e0] sm:$0xff]
      %v699 = vld [vmem:[%s3 + $0x1e8] sm:$0xff]
      %v700 = vld [vmem:[%s3 + $0x1f0] sm:$0xff]
      %v701 = vld [vmem:[%s3 + $0x1f8] sm:$0xff]
      %v702 = vld [vmem:[%s3 + $0x200] sm:$0xff]
      %v703 = vld [vmem:[%s3 + $0x208] sm:$0xff]
      %v704 = vld [vmem:[%s3 + $0x210] sm:$0xff]
      %v705 = vld [vmem:[%s3 + $0x218] sm:$0xff]
      %v706 = vld [vmem:[%s3 + $0x220] sm:$0xff]
      %v707 = vld [vmem:[%s3 + $0x228] sm:$0xff]
      %v708 = vld [vmem:[%s3 + $0x230] sm:$0xff]
      %v709 = vld [vmem:[%s3 + $0x238] sm:$0xff]
      %v710 = vld [vmem:[%s3 + $0x240] sm:$0xff]
      %v711 = vld [vmem:[%s3 + $0x248] sm:$0xff]
      %v712 = vld [vmem:[%s3 + $0x250] sm:$0xff]
      %v713 = vld [vmem:[%s3 + $0x258] sm:$0xff]
      %v714 = vld [vmem:[%s3 + $0x260] sm:$0xff]
      %v715 = vld [vmem:[%s3 + $0x268] sm:$0xff]
      %v716 = vld [vmem:[%s3 + $0x270] sm:$0xff]
      %v717 = vld [vmem:[%s3 + $0x278] sm:$0xff]
      %v718 = vld [vmem:[%s3 + $0x280] sm:$0xff]
      %v719 = vld [vmem:[%s3 + $0x288] sm:$0xff]
      %v720 = vld [vmem:[%s3 + $0x290] sm:$0xff]
      %v721 = vld [vmem:[%s3 + $0x298] sm:$0xff]
      %v722 = vld [vmem:[%s3 + $0x2a0] sm:$0xff]
      %v723 = vld [vmem:[%s3 + $0x2a8] sm:$0xff]
      %v724 = vld [vmem:[%s3 + $0x2b0] sm:$0xff]
      %v725 = vld [vmem:[%s3 + $0x2b8] sm:$0xff]
      %v726 = vld [vmem:[%s3 + $0x2c0] sm:$0xff]
      %v727 = vld [vmem:[%s3 + $0x2c8] sm:$0xff]
      %v728 = vld [vmem:[%s3 + $0x2d0] sm:$0xff]
      %v729 = vld [vmem:[%s3 + $0x2d8] sm:$0xff]
      %v730 = vld [vmem:[%s3 + $0x2e0] sm:$0xff]
      %v731 = vld [vmem:[%s3 + $0x2e8] sm:$0xff]
      %v732 = vld [vmem:[%s3 + $0x2f0] sm:$0xff]
      %v733 = vld [vmem:[%s3 + $0x2f8] sm:$0xff]
      %v734 = vld [vmem:[%s4] sm:$0x3]
      %v736 = vlaneseq
      %v737 = vshrl.u32 %v736, 7
      %v738 = vsub.s32 0, %v737
      %v739 = vrot.slane %v734, %v738
      %v740 = vlaneseq
      %v741 = vshrl.u32 %v740, 7
      %v742 = vsub.s32 1, %v741
      %v743 = vrot.slane %v734, %v742
      %v746 = vld [vmem:[#allocation2] sm:$0xff]
      %v747 = vld [vmem:[#allocation2 + $0x8] sm:$0xff]
      %s748 = smul.u32 0, 6
      %s749 = smul.addr %s748, 8
      %s750 = scalar_lea.vmem [#allocation3], %s749
      %v751 = vld [vmem:[%s750] sm:$0xff]
      %v752 = vld [vmem:[%s750 + $0x8] sm:$0xff]
      %v753 = vld [vmem:[%s750 + $0x10] sm:$0xff]
      %v754 = vld [vmem:[%s750 + $0x18] sm:$0xff]
      %v755 = vld [vmem:[%s750 + $0x20] sm:$0xff]
      %v756 = vld [vmem:[%s750 + $0x28] sm:$0xff]
      %v757 = vpack.c.bf16 %v746, %v746
      %v758 = vpack.c.bf16 %v747, %v747
      %v855 = vunpack.c.l.b16 %v638
      %v856 = vunpack.c.h.b16 %v638
      %v857 = vunpack.c.l.b16 %v639
      %v858 = vunpack.c.h.b16 %v639
      %v859 = vunpack.c.l.b16 %v640
      %v860 = vunpack.c.h.b16 %v640
      %v861 = vunpack.c.l.b16 %v641
      %v862 = vunpack.c.h.b16 %v641
      %v863 = vunpack.c.l.b16 %v642
      %v864 = vunpack.c.h.b16 %v642
      %v865 = vunpack.c.l.b16 %v643
      %v866 = vunpack.c.h.b16 %v643
      %v867 = vunpack.c.l.b16 %v644
      %v868 = vunpack.c.h.b16 %v644
      %v869 = vunpack.c.l.b16 %v645
      %v870 = vunpack.c.h.b16 %v645
      %v871 = vunpack.c.l.b16 %v646
      %v872 = vunpack.c.h.b16 %v646
      %v873 = vunpack.c.l.b16 %v647
      %v874 = vunpack.c.h.b16 %v647
      %v875 = vunpack.c.l.b16 %v648
      %v876 = vunpack.c.h.b16 %v648
      %v877 = vunpack.c.l.b16 %v649
      %v878 = vunpack.c.h.b16 %v649
      %v879 = vunpack.c.l.b16 %v650
      %v880 = vunpack.c.h.b16 %v650
      %v881 = vunpack.c.l.b16 %v651
      %v882 = vunpack.c.h.b16 %v651
      %v883 = vunpack.c.l.b16 %v652
      %v884 = vunpack.c.h.b16 %v652
      %v885 = vunpack.c.l.b16 %v653
      %v886 = vunpack.c.h.b16 %v653
      %v887 = vunpack.c.l.b16 %v654
      %v888 = vunpack.c.h.b16 %v654
      %v889 = vunpack.c.l.b16 %v655
      %v890 = vunpack.c.h.b16 %v655
      %v891 = vunpack.c.l.b16 %v656
      %v892 = vunpack.c.h.b16 %v656
      %v893 = vunpack.c.l.b16 %v657
      %v894 = vunpack.c.h.b16 %v657
      %v895 = vunpack.c.l.b16 %v658
      %v896 = vunpack.c.h.b16 %v658
      %v897 = vunpack.c.l.b16 %v659
      %v898 = vunpack.c.h.b16 %v659
      %v899 = vunpack.c.l.b16 %v660
      %v900 = vunpack.c.h.b16 %v660
      %v901 = vunpack.c.l.b16 %v661
      %v902 = vunpack.c.h.b16 %v661
      %v903 = vunpack.c.l.b16 %v662
      %v904 = vunpack.c.h.b16 %v662
      %v905 = vunpack.c.l.b16 %v663
      %v906 = vunpack.c.h.b16 %v663
      %v907 = vunpack.c.l.b16 %v664
      %v908 = vunpack.c.h.b16 %v664
      %v909 = vunpack.c.l.b16 %v665
      %v910 = vunpack.c.h.b16 %v665
      %v911 = vunpack.c.l.b16 %v666
      %v912 = vunpack.c.h.b16 %v666
      %v913 = vunpack.c.l.b16 %v667
      %v914 = vunpack.c.h.b16 %v667
      %v915 = vunpack.c.l.b16 %v668
      %v916 = vunpack.c.h.b16 %v668
      %v917 = vunpack.c.l.b16 %v669
      %v918 = vunpack.c.h.b16 %v669
      %v919 = vunpack.c.l.b16 %v670
      %v920 = vunpack.c.h.b16 %v670
      %v921 = vunpack.c.l.b16 %v671
      %v922 = vunpack.c.h.b16 %v671
      %v923 = vunpack.c.l.b16 %v672
      %v924 = vunpack.c.h.b16 %v672
      %v925 = vunpack.c.l.b16 %v673
      %v926 = vunpack.c.h.b16 %v673
      %v927 = vunpack.c.l.b16 %v674
      %v928 = vunpack.c.h.b16 %v674
      %v929 = vunpack.c.l.b16 %v675
      %v930 = vunpack.c.h.b16 %v675
      %v931 = vunpack.c.l.b16 %v676
      %v932 = vunpack.c.h.b16 %v676
      %v933 = vunpack.c.l.b16 %v677
      %v934 = vunpack.c.h.b16 %v677
      %v935 = vunpack.c.l.b16 %v678
      %v936 = vunpack.c.h.b16 %v678
      %v937 = vunpack.c.l.b16 %v679
      %v938 = vunpack.c.h.b16 %v679
      %v939 = vunpack.c.l.b16 %v680
      %v940 = vunpack.c.h.b16 %v680
      %v941 = vunpack.c.l.b16 %v681
      %v942 = vunpack.c.h.b16 %v681
      %v943 = vunpack.c.l.b16 %v682
      %v944 = vunpack.c.h.b16 %v682
      %v945 = vunpack.c.l.b16 %v683
      %v946 = vunpack.c.h.b16 %v683
      %v947 = vunpack.c.l.b16 %v684
      %v948 = vunpack.c.h.b16 %v684
      %v949 = vunpack.c.l.b16 %v685
      %v950 = vunpack.c.h.b16 %v685
      %v951 = vunpack.c.l.b16 %v686
      %v952 = vunpack.c.h.b16 %v686
      %v953 = vunpack.c.l.b16 %v687
      %v954 = vunpack.c.h.b16 %v687
      %v955 = vunpack.c.l.b16 %v688
      %v956 = vunpack.c.h.b16 %v688
      %v957 = vunpack.c.l.b16 %v689
      %v958 = vunpack.c.h.b16 %v689
      %v959 = vunpack.c.l.b16 %v690
      %v960 = vunpack.c.h.b16 %v690
      %v961 = vunpack.c.l.b16 %v691
      %v962 = vunpack.c.h.b16 %v691
      %v963 = vunpack.c.l.b16 %v692
      %v964 = vunpack.c.h.b16 %v692
      %v965 = vunpack.c.l.b16 %v693
      %v966 = vunpack.c.h.b16 %v693
      %v967 = vunpack.c.l.b16 %v694
      %v968 = vunpack.c.h.b16 %v694
      %v969 = vunpack.c.l.b16 %v695
      %v970 = vunpack.c.h.b16 %v695
      %v971 = vunpack.c.l.b16 %v696
      %v972 = vunpack.c.h.b16 %v696
      %v973 = vunpack.c.l.b16 %v697
      %v974 = vunpack.c.h.b16 %v697
      %v975 = vunpack.c.l.b16 %v698
      %v976 = vunpack.c.h.b16 %v698
      %v977 = vunpack.c.l.b16 %v699
      %v978 = vunpack.c.h.b16 %v699
      %v979 = vunpack.c.l.b16 %v700
      %v980 = vunpack.c.h.b16 %v700
      %v981 = vunpack.c.l.b16 %v701
      %v982 = vunpack.c.h.b16 %v701
      %v983 = vunpack.c.l.b16 %v702
      %v984 = vunpack.c.h.b16 %v702
      %v985 = vunpack.c.l.b16 %v703
      %v986 = vunpack.c.h.b16 %v703
      %v987 = vunpack.c.l.b16 %v704
      %v988 = vunpack.c.h.b16 %v704
      %v989 = vunpack.c.l.b16 %v705
      %v990 = vunpack.c.h.b16 %v705
      %v991 = vunpack.c.l.b16 %v706
      %v992 = vunpack.c.h.b16 %v706
      %v993 = vunpack.c.l.b16 %v707
      %v994 = vunpack.c.h.b16 %v707
      %v995 = vunpack.c.l.b16 %v708
      %v996 = vunpack.c.h.b16 %v708
      %v997 = vunpack.c.l.b16 %v709
      %v998 = vunpack.c.h.b16 %v709
      %v999 = vunpack.c.l.b16 %v710
      %v1000 = vunpack.c.h.b16 %v710
      %v1001 = vunpack.c.l.b16 %v711
      %v1002 = vunpack.c.h.b16 %v711
      %v1003 = vunpack.c.l.b16 %v712
      %v1004 = vunpack.c.h.b16 %v712
      %v1005 = vunpack.c.l.b16 %v713
      %v1006 = vunpack.c.h.b16 %v713
      %v1007 = vunpack.c.l.b16 %v714
      %v1008 = vunpack.c.h.b16 %v714
      %v1009 = vunpack.c.l.b16 %v715
      %v1010 = vunpack.c.h.b16 %v715
      %v1011 = vunpack.c.l.b16 %v716
      %v1012 = vunpack.c.h.b16 %v716
      %v1013 = vunpack.c.l.b16 %v717
      %v1014 = vunpack.c.h.b16 %v717
      %v1015 = vunpack.c.l.b16 %v718
      %v1016 = vunpack.c.h.b16 %v718
      %v1017 = vunpack.c.l.b16 %v719
      %v1018 = vunpack.c.h.b16 %v719
      %v1019 = vunpack.c.l.b16 %v720
      %v1020 = vunpack.c.h.b16 %v720
      %v1021 = vunpack.c.l.b16 %v721
      %v1022 = vunpack.c.h.b16 %v721
      %v1023 = vunpack.c.l.b16 %v722
      %v1024 = vunpack.c.h.b16 %v722
      %v1025 = vunpack.c.l.b16 %v723
      %v1026 = vunpack.c.h.b16 %v723
      %v1027 = vunpack.c.l.b16 %v724
      %v1028 = vunpack.c.h.b16 %v724
      %v1029 = vunpack.c.l.b16 %v725
      %v1030 = vunpack.c.h.b16 %v725
      %v1031 = vunpack.c.l.b16 %v726
      %v1032 = vunpack.c.h.b16 %v726
      %v1033 = vunpack.c.l.b16 %v727
      %v1034 = vunpack.c.h.b16 %v727
      %v1035 = vunpack.c.l.b16 %v728
      %v1036 = vunpack.c.h.b16 %v728
      %v1037 = vunpack.c.l.b16 %v729
      %v1038 = vunpack.c.h.b16 %v729
      %v1039 = vunpack.c.l.b16 %v730
      %v1040 = vunpack.c.h.b16 %v730
      %v1041 = vunpack.c.l.b16 %v731
      %v1042 = vunpack.c.h.b16 %v731
      %v1043 = vunpack.c.l.b16 %v732
      %v1044 = vunpack.c.h.b16 %v732
      %v1045 = vunpack.c.l.b16 %v733
      %v1046 = vunpack.c.h.b16 %v733
      %v1047 = vpack.c.b16 %v861, %v855
      %v1048 = vpack.c.b16 %v862, %v856
      %v1049 = vpack.c.b16 %v863, %v857
      %v1050 = vpack.c.b16 %v864, %v858
      %v1051 = vpack.c.b16 %v865, %v859
      %v1052 = vpack.c.b16 %v866, %v860
      %v1053 = vpack.c.b16 %v873, %v867
      %v1054 = vpack.c.b16 %v874, %v868
      %v1055 = vpack.c.b16 %v875, %v869
      %v1056 = vpack.c.b16 %v876, %v870
      %v1057 = vpack.c.b16 %v877, %v871
      %v1058 = vpack.c.b16 %v878, %v872
      %v1059 = vpack.c.b16 %v885, %v879
      %v1060 = vpack.c.b16 %v886, %v880
      %v1061 = vpack.c.b16 %v887, %v881
      %v1062 = vpack.c.b16 %v888, %v882
      %v1063 = vpack.c.b16 %v889, %v883
      %v1064 = vpack.c.b16 %v890, %v884
      %v1065 = vpack.c.b16 %v897, %v891
      %v1066 = vpack.c.b16 %v898, %v892
      %v1067 = vpack.c.b16 %v899, %v893
      %v1068 = vpack.c.b16 %v900, %v894
      %v1069 = vpack.c.b16 %v901, %v895
      %v1070 = vpack.c.b16 %v902, %v896
      %v1071 = vpack.c.b16 %v909, %v903
      %v1072 = vpack.c.b16 %v910, %v904
      %v1073 = vpack.c.b16 %v911, %v905
      %v1074 = vpack.c.b16 %v912, %v906
      %v1075 = vpack.c.b16 %v913, %v907
      %v1076 = vpack.c.b16 %v914, %v908
      %v1077 = vpack.c.b16 %v921, %v915
      %v1078 = vpack.c.b16 %v922, %v916
      %v1079 = vpack.c.b16 %v923, %v917
      %v1080 = vpack.c.b16 %v924, %v918
      %v1081 = vpack.c.b16 %v925, %v919
      %v1082 = vpack.c.b16 %v926, %v920
      %v1083 = vpack.c.b16 %v933, %v927
      %v1084 = vpack.c.b16 %v934, %v928
      %v1085 = vpack.c.b16 %v935, %v929
      %v1086 = vpack.c.b16 %v936, %v930
      %v1087 = vpack.c.b16 %v937, %v931
      %v1088 = vpack.c.b16 %v938, %v932
      %v1089 = vpack.c.b16 %v945, %v939
      %v1090 = vpack.c.b16 %v946, %v940
      %v1091 = vpack.c.b16 %v947, %v941
      %v1092 = vpack.c.b16 %v948, %v942
      %v1093 = vpack.c.b16 %v949, %v943
      %v1094 = vpack.c.b16 %v950, %v944
      %v1095 = vpack.c.b16 %v957, %v951
      %v1096 = vpack.c.b16 %v958, %v952
      %v1097 = vpack.c.b16 %v959, %v953
      %v1098 = vpack.c.b16 %v960, %v954
      %v1099 = vpack.c.b16 %v961, %v955
      %v1100 = vpack.c.b16 %v962, %v956
      %v1101 = vpack.c.b16 %v969, %v963
      %v1102 = vpack.c.b16 %v970, %v964
      %v1103 = vpack.c.b16 %v971, %v965
      %v1104 = vpack.c.b16 %v972, %v966
      %v1105 = vpack.c.b16 %v973, %v967
      %v1106 = vpack.c.b16 %v974, %v968
      %v1107 = vpack.c.b16 %v981, %v975
      %v1108 = vpack.c.b16 %v982, %v976
      %v1109 = vpack.c.b16 %v983, %v977
      %v1110 = vpack.c.b16 %v984, %v978
      %v1111 = vpack.c.b16 %v985, %v979
      %v1112 = vpack.c.b16 %v986, %v980
      %v1113 = vpack.c.b16 %v993, %v987
      %v1114 = vpack.c.b16 %v994, %v988
      %v1115 = vpack.c.b16 %v995, %v989
      %v1116 = vpack.c.b16 %v996, %v990
      %v1117 = vpack.c.b16 %v997, %v991
      %v1118 = vpack.c.b16 %v998, %v992
      %v1119 = vpack.c.b16 %v1005, %v999
      %v1120 = vpack.c.b16 %v1006, %v1000
      %v1121 = vpack.c.b16 %v1007, %v1001
      %v1122 = vpack.c.b16 %v1008, %v1002
      %v1123 = vpack.c.b16 %v1009, %v1003
      %v1124 = vpack.c.b16 %v1010, %v1004
      %v1125 = vpack.c.b16 %v1017, %v1011
      %v1126 = vpack.c.b16 %v1018, %v1012
      %v1127 = vpack.c.b16 %v1019, %v1013
      %v1128 = vpack.c.b16 %v1020, %v1014
      %v1129 = vpack.c.b16 %v1021, %v1015
      %v1130 = vpack.c.b16 %v1022, %v1016
      %v1131 = vpack.c.b16 %v1029, %v1023
      %v1132 = vpack.c.b16 %v1030, %v1024
      %v1133 = vpack.c.b16 %v1031, %v1025
      %v1134 = vpack.c.b16 %v1032, %v1026
      %v1135 = vpack.c.b16 %v1033, %v1027
      %v1136 = vpack.c.b16 %v1034, %v1028
      %v1137 = vpack.c.b16 %v1041, %v1035
      %v1138 = vpack.c.b16 %v1042, %v1036
      %v1139 = vpack.c.b16 %v1043, %v1037
      %v1140 = vpack.c.b16 %v1044, %v1038
      %v1141 = vpack.c.b16 %v1045, %v1039
      %v1142 = vpack.c.b16 %v1046, %v1040
      %1239 = vmatprep.subr.bf16.mxu0 %v1048
      %1240 = vmatpush1.bf16.msra.mxu0 %v1047
      %1241 = vmatprep.subr.bf16.mxu0 %v1054
      %1242 = vmatpush1.bf16.msra.mxu0 %v1053
      %1243 = vmatprep.subr.bf16.mxu0 %v1060
      %1244 = vmatpush1.bf16.msra.mxu0 %v1059
      %1245 = vmatprep.subr.bf16.mxu0 %v1066
      %1246 = vmatpush1.bf16.msra.mxu0 %v1065
      %1247 = vmatprep.subr.bf16.mxu0 %v1072
      %1248 = vmatpush1.bf16.msra.mxu0 %v1071
      %1249 = vmatprep.subr.bf16.mxu0 %v1078
      %1250 = vmatpush1.bf16.msra.mxu0 %v1077
      %1251 = vmatprep.subr.bf16.mxu0 %v1084
      %1252 = vmatpush1.bf16.msra.mxu0 %v1083
      %1253 = vmatprep.subr.bf16.mxu0 %v1090
      %1254 = vmatpush1.bf16.msra.mxu0 %v1089
      %1255 = vmatprep.subr.bf16.mxu0 %v1096
      %1256 = vmatpush1.bf16.msra.mxu0 %v1095
      %1257 = vmatprep.subr.bf16.mxu0 %v1102
      %1258 = vmatpush1.bf16.msra.mxu0 %v1101
      %1259 = vmatprep.subr.bf16.mxu0 %v1108
      %1260 = vmatpush1.bf16.msra.mxu0 %v1107
      %1261 = vmatprep.subr.bf16.mxu0 %v1114
      %1262 = vmatpush1.bf16.msra.mxu0 %v1113
      %1263 = vmatprep.subr.bf16.mxu0 %v1120
      %1264 = vmatpush1.bf16.msra.mxu0 %v1119
      %1265 = vmatprep.subr.bf16.mxu0 %v1126
      %1266 = vmatpush1.bf16.msra.mxu0 %v1125
      %1267 = vmatprep.subr.bf16.mxu0 %v1132
      %1268 = vmatpush1.bf16.msra.mxu0 %v1131
      %1269 = vmatprep.subr.bf16.mxu0 %v1138
      %1270 = vmatpush1.bf16.msra.mxu0 %v1137
      %1271 = vmatprep.mubr.bf16.mxu0 %v758
      %1272 = vmatmul.mubr.bf16.gmra.mrb[0].mxu0 %v757
      %v1273 = vpop.f32.mrb[0].mxu0
      %v1274 = vadd.f32 0.0, %v1273
      %v1275 = vpop.f32.mrb[0].mxu0
      %v1276 = vadd.f32 0.0, %v1275
      %v1277 = vpop.f32.mrb[0].mxu0
      %v1278 = vpop.f32.mrb[0].mxu0
      %1279 = vdwg.mxu0
      %1280 = vmatprep.subr.bf16.mxu0 %v1050
      %1281 = vmatpush1.bf16.msra.mxu0 %v1049
      %1282 = vmatprep.subr.bf16.mxu0 %v1056
      %1283 = vmatpush1.bf16.msra.mxu0 %v1055
      %1284 = vmatprep.subr.bf16.mxu0 %v1062
      %1285 = vmatpush1.bf16.msra.mxu0 %v1061
      %1286 = vmatprep.subr.bf16.mxu0 %v1068
      %1287 = vmatpush1.bf16.msra.mxu0 %v1067
      %1288 = vmatprep.subr.bf16.mxu0 %v1074
      %1289 = vmatpush1.bf16.msra.mxu0 %v1073
      %1290 = vmatprep.subr.bf16.mxu0 %v1080
      %1291 = vmatpush1.bf16.msra.mxu0 %v1079
      %1292 = vmatprep.subr.bf16.mxu0 %v1086
      %1293 = vmatpush1.bf16.msra.mxu0 %v1085
      %1294 = vmatprep.subr.bf16.mxu0 %v1092
      %1295 = vmatpush1.bf16.msra.mxu0 %v1091
      %1296 = vmatprep.subr.bf16.mxu0 %v1098
      %1297 = vmatpush1.bf16.msra.mxu0 %v1097
      %1298 = vmatprep.subr.bf16.mxu0 %v1104
      %1299 = vmatpush1.bf16.msra.mxu0 %v1103
      %1300 = vmatprep.subr.bf16.mxu0 %v1110
      %1301 = vmatpush1.bf16.msra.mxu0 %v1109
      %1302 = vmatprep.subr.bf16.mxu0 %v1116
      %1303 = vmatpush1.bf16.msra.mxu0 %v1115
      %1304 = vmatprep.subr.bf16.mxu0 %v1122
      %1305 = vmatpush1.bf16.msra.mxu0 %v1121
      %1306 = vmatprep.subr.bf16.mxu0 %v1128
      %1307 = vmatpush1.bf16.msra.mxu0 %v1127
      %1308 = vmatprep.subr.bf16.mxu0 %v1134
      %1309 = vmatpush1.bf16.msra.mxu0 %v1133
      %1310 = vmatprep.subr.bf16.mxu0 %v1140
      %1311 = vmatpush1.bf16.msra.mxu0 %v1139
      %1312 = vmatprep.mubr.bf16.mxu0 %v758
      %1313 = vmatmul.mubr.bf16.gmra.mrb[0].mxu0 %v757
      %v1314 = vpop.f32.mrb[0].mxu0
      %v1315 = vadd.f32 0.0, %v1314
      %v1316 = vpop.f32.mrb[0].mxu0
      %v1317 = vadd.f32 0.0, %v1316
      %v1318 = vpop.f32.mrb[0].mxu0
      %v1319 = vpop.f32.mrb[0].mxu0
      %1320 = vdwg.mxu0
      %1321 = vmatprep.subr.bf16.mxu0 %v1052
      %1322 = vmatpush1.bf16.msra.mxu0 %v1051
      %1323 = vmatprep.subr.bf16.mxu0 %v1058
      %1324 = vmatpush1.bf16.msra.mxu0 %v1057
      %1325 = vmatprep.subr.bf16.mxu0 %v1064
      %1326 = vmatpush1.bf16.msra.mxu0 %v1063
      %1327 = vmatprep.subr.bf16.mxu0 %v1070
      %1328 = vmatpush1.bf16.msra.mxu0 %v1069
      %1329 = vmatprep.subr.bf16.mxu0 %v1076
      %1330 = vmatpush1.bf16.msra.mxu0 %v1075
      %1331 = vmatprep.subr.bf16.mxu0 %v1082
      %1332 = vmatpush1.bf16.msra.mxu0 %v1081
      %1333 = vmatprep.subr.bf16.mxu0 %v1088
      %1334 = vmatpush1.bf16.msra.mxu0 %v1087
      %1335 = vmatprep.subr.bf16.mxu0 %v1094
      %1336 = vmatpush1.bf16.msra.mxu0 %v1093
      %1337 = vmatprep.subr.bf16.mxu0 %v1100
      %1338 = vmatpush1.bf16.msra.mxu0 %v1099
      %1339 = vmatprep.subr.bf16.mxu0 %v1106
      %1340 = vmatpush1.bf16.msra.mxu0 %v1105
      %1341 = vmatprep.subr.bf16.mxu0 %v1112
      %1342 = vmatpush1.bf16.msra.mxu0 %v1111
      %1343 = vmatprep.subr.bf16.mxu0 %v1118
      %1344 = vmatpush1.bf16.msra.mxu0 %v1117
      %1345 = vmatprep.subr.bf16.mxu0 %v1124
      %1346 = vmatpush1.bf16.msra.mxu0 %v1123
      %1347 = vmatprep.subr.bf16.mxu0 %v1130
      %1348 = vmatpush1.bf16.msra.mxu0 %v1129
      %1349 = vmatprep.subr.bf16.mxu0 %v1136
      %1350 = vmatpush1.bf16.msra.mxu0 %v1135
      %1351 = vmatprep.subr.bf16.mxu0 %v1142
      %1352 = vmatpush1.bf16.msra.mxu0 %v1141
      %1353 = vmatprep.mubr.bf16.mxu0 %v758
      %1354 = vmatmul.mubr.bf16.gmra.mrb[0].mxu0 %v757
      %v1355 = vpop.f32.mrb[0].mxu0
      %v1356 = vadd.f32 0.0, %v1355
      %v1357 = vpop.f32.mrb[0].mxu0
      %v1358 = vadd.f32 0.0, %v1357
      %v1359 = vpop.f32.mrb[0].mxu0
      %v1360 = vpop.f32.mrb[0].mxu0
      %1361 = vdwg.mxu0
      %v1362 = vadd.f32 %v751, %v1274
      %v1363 = vadd.f32 %v752, %v1276
      %v1364 = vxor.u32 %v1362, 2147483648
      %v1365 = vxor.u32 %v1363, 2147483648
      %v1366 = vmul.f32 %v1364, 1.442695
      %v1367 = vpow.pop %v1366
      %v1368 = vmul.f32 %v1365, 1.442695
      %v1369 = vpow.pop %v1368
      %v1370 = vadd.f32 %v1367, 1.0
      %v1371 = vadd.f32 %v1369, 1.0
      %v1372 = vrcp.pop %v1370
      %v1373 = vmul.f32 1.0, %v1372
      %v1374 = vrcp.pop %v1371
      %v1375 = vmul.f32 1.0, %v1374
      %v1376 = vadd.f32 %v753, %v1315
      %v1377 = vadd.f32 %v754, %v1317
      %v1378 = vxor.u32 %v1376, 2147483648
      %v1379 = vxor.u32 %v1377, 2147483648
      %v1380 = vmul.f32 %v1378, 1.442695
      %v1381 = vpow.pop %v1380
      %v1382 = vmul.f32 %v1379, 1.442695
      %v1383 = vpow.pop %v1382
      %v1384 = vadd.f32 %v1381, 1.0
      %v1385 = vadd.f32 %v1383, 1.0
      %v1386 = vrcp.pop %v1384
      %v1387 = vmul.f32 1.0, %v1386
      %v1388 = vrcp.pop %v1385
      %v1389 = vmul.f32 1.0, %v1388
      %v1390 = vadd.f32 %v1356, %v739
      %v1391 = vadd.f32 %v1358, %v743
      %v1392 = vmul.f32 %v1373, %v1390
      %v1393 = vmul.f32 %v1375, %v1391
      %v1394 = vadd.f32 %v755, %v1392
      %v1395 = vadd.f32 %v756, %v1393
      %v1396 = vtanh.pop %v1394
      %v1397 = vtanh.pop %v1395
      %v1398 = vsub.f32 %v746, %v1396
      %v1399 = vsub.f32 %v747, %v1397
      %v1400 = vmul.f32 %v1387, %v1398
      %v1401 = vmul.f32 %v1389, %v1399
      %v1402 = vadd.f32 %v1396, %v1400
      %v1403 = vadd.f32 %v1397, %v1401
      %s1404 = smul.u32 1, 6
      %s1405 = smul.addr %s1404, 8
      %s1406 = scalar_lea.vmem [#allocation3], %s1405
      %v1407 = vld [vmem:[%s1406] sm:$0xff]
      %v1408 = vld [vmem:[%s1406 + $0x8] sm:$0xff]
      %v1409 = vld [vmem:[%s1406 + $0x10] sm:$0xff]
      %v1410 = vld [vmem:[%s1406 + $0x18] sm:$0xff]
      %v1411 = vld [vmem:[%s1406 + $0x20] sm:$0xff]
      %v1412 = vld [vmem:[%s1406 + $0x28] sm:$0xff]
      %v1413 = vpack.c.bf16 %v1402, %v1402
      %v1414 = vpack.c.bf16 %v1403, %v1403
      %1415 = vmatprep.subr.bf16.mxu0 %v1048
      %1416 = vmatpush1.bf16.msra.mxu0 %v1047
      %1417 = vmatprep.subr.bf16.mxu0 %v1054
      %1418 = vmatpush1.bf16.msra.mxu0 %v1053
      %1419 = vmatprep.subr.bf16.mxu0 %v1060
      %1420 = vmatpush1.bf16.msra.mxu0 %v1059
      %1421 = vmatprep.subr.bf16.mxu0 %v1066
      %1422 = vmatpush1.bf16.msra.mxu0 %v1065
      %1423 = vmatprep.subr.bf16.mxu0 %v1072
      %1424 = vmatpush1.bf16.msra.mxu0 %v1071
      %1425 = vmatprep.subr.bf16.mxu0 %v1078
      %1426 = vmatpush1.bf16.msra.mxu0 %v1077
      %1427 = vmatprep.subr.bf16.mxu0 %v1084
      %1428 = vmatpush1.bf16.msra.mxu0 %v1083
      %1429 = vmatprep.subr.bf16.mxu0 %v1090
      %1430 = vmatpush1.bf16.msra.mxu0 %v1089
      %1431 = vmatprep.subr.bf16.mxu0 %v1096
      %1432 = vmatpush1.bf16.msra.mxu0 %v1095
      %1433 = vmatprep.subr.bf16.mxu0 %v1102
      %1434 = vmatpush1.bf16.msra.mxu0 %v1101
      %1435 = vmatprep.subr.bf16.mxu0 %v1108
      %1436 = vmatpush1.bf16.msra.mxu0 %v1107
      %1437 = vmatprep.subr.bf16.mxu0 %v1114
      %1438 = vmatpush1.bf16.msra.mxu0 %v1113
      %1439 = vmatprep.subr.bf16.mxu0 %v1120
      %1440 = vmatpush1.bf16.msra.mxu0 %v1119
      %1441 = vmatprep.subr.bf16.mxu0 %v1126
      %1442 = vmatpush1.bf16.msra.mxu0 %v1125
      %1443 = vmatprep.subr.bf16.mxu0 %v1132
      %1444 = vmatpush1.bf16.msra.mxu0 %v1131
      %1445 = vmatprep.subr.bf16.mxu0 %v1138
      %1446 = vmatpush1.bf16.msra.mxu0 %v1137
      %1447 = vmatprep.mubr.bf16.mxu0 %v1414
      %1448 = vmatmul.mubr.bf16.gmra.mrb[0].mxu0 %v1413
      %v1449 = vpop.f32.mrb[0].mxu0
      %v1450 = vadd.f32 0.0, %v1449
      %v1451 = vpop.f32.mrb[0].mxu0
      %v1452 = vadd.f32 0.0, %v1451
      %v1453 = vpop.f32.mrb[0].mxu0
      %v1454 = vpop.f32.mrb[0].mxu0
      %1455 = vdwg.mxu0
      %1456 = vmatprep.subr.bf16.mxu0 %v1050
      %1457 = vmatpush1.bf16.msra.mxu0 %v1049
      %1458 = vmatprep.subr.bf16.mxu0 %v1056
      %1459 = vmatpush1.bf16.msra.mxu0 %v1055
      %1460 = vmatprep.subr.bf16.mxu0 %v1062
      %1461 = vmatpush1.bf16.msra.mxu0 %v1061
      %1462 = vmatprep.subr.bf16.mxu0 %v1068
      %1463 = vmatpush1.bf16.msra.mxu0 %v1067
      %1464 = vmatprep.subr.bf16.mxu0 %v1074
      %1465 = vmatpush1.bf16.msra.mxu0 %v1073
      %1466 = vmatprep.subr.bf16.mxu0 %v1080
      %1467 = vmatpush1.bf16.msra.mxu0 %v1079
      %1468 = vmatprep.subr.bf16.mxu0 %v1086
      %1469 = vmatpush1.bf16.msra.mxu0 %v1085
      %1470 = vmatprep.subr.bf16.mxu0 %v1092
      %1471 = vmatpush1.bf16.msra.mxu0 %v1091
      %1472 = vmatprep.subr.bf16.mxu0 %v1098
      %1473 = vmatpush1.bf16.msra.mxu0 %v1097
      %1474 = vmatprep.subr.bf16.mxu0 %v1104
      %1475 = vmatpush1.bf16.msra.mxu0 %v1103
      %1476 = vmatprep.subr.bf16.mxu0 %v1110
      %1477 = vmatpush1.bf16.msra.mxu0 %v1109
      %1478 = vmatprep.subr.bf16.mxu0 %v1116
      %1479 = vmatpush1.bf16.msra.mxu0 %v1115
      %1480 = vmatprep.subr.bf16.mxu0 %v1122
      %1481 = vmatpush1.bf16.msra.mxu0 %v1121
      %1482 = vmatprep.subr.bf16.mxu0 %v1128
      %1483 = vmatpush1.bf16.msra.mxu0 %v1127
      %1484 = vmatprep.subr.bf16.mxu0 %v1134
      %1485 = vmatpush1.bf16.msra.mxu0 %v1133
      %1486 = vmatprep.subr.bf16.mxu0 %v1140
      %1487 = vmatpush1.bf16.msra.mxu0 %v1139
      %1488 = vmatprep.mubr.bf16.mxu0 %v1414
      %1489 = vmatmul.mubr.bf16.gmra.mrb[0].mxu0 %v1413
      %v1490 = vpop.f32.mrb[0].mxu0
      %v1491 = vadd.f32 0.0, %v1490
      %v1492 = vpop.f32.mrb[0].mxu0
      %v1493 = vadd.f32 0.0, %v1492
      %v1494 = vpop.f32.mrb[0].mxu0
      %v1495 = vpop.f32.mrb[0].mxu0
      %1496 = vdwg.mxu0
      %1497 = vmatprep.subr.bf16.mxu0 %v1052
      %1498 = vmatpush1.bf16.msra.mxu0 %v1051
      %1499 = vmatprep.subr.bf16.mxu0 %v1058
      %1500 = vmatpush1.bf16.msra.mxu0 %v1057
      %1501 = vmatprep.subr.bf16.mxu0 %v1064
      %1502 = vmatpush1.bf16.msra.mxu0 %v1063
      %1503 = vmatprep.subr.bf16.mxu0 %v1070
      %1504 = vmatpush1.bf16.msra.mxu0 %v1069
      %1505 = vmatprep.subr.bf16.mxu0 %v1076
      %1506 = vmatpush1.bf16.msra.mxu0 %v1075
      %1507 = vmatprep.subr.bf16.mxu0 %v1082
      %1508 = vmatpush1.bf16.msra.mxu0 %v1081
      %1509 = vmatprep.subr.bf16.mxu0 %v1088
      %1510 = vmatpush1.bf16.msra.mxu0 %v1087
      %1511 = vmatprep.subr.bf16.mxu0 %v1094
      %1512 = vmatpush1.bf16.msra.mxu0 %v1093
      %1513 = vmatprep.subr.bf16.mxu0 %v1100
      %1514 = vmatpush1.bf16.msra.mxu0 %v1099
      %1515 = vmatprep.subr.bf16.mxu0 %v1106
      %1516 = vmatpush1.bf16.msra.mxu0 %v1105
      %1517 = vmatprep.subr.bf16.mxu0 %v1112
      %1518 = vmatpush1.bf16.msra.mxu0 %v1111
      %1519 = vmatprep.subr.bf16.mxu0 %v1118
      %1520 = vmatpush1.bf16.msra.mxu0 %v1117
      %1521 = vmatprep.subr.bf16.mxu0 %v1124
      %1522 = vmatpush1.bf16.msra.mxu0 %v1123
      %1523 = vmatprep.subr.bf16.mxu0 %v1130
      %1524 = vmatpush1.bf16.msra.mxu0 %v1129
      %1525 = vmatprep.subr.bf16.mxu0 %v1136
      %1526 = vmatpush1.bf16.msra.mxu0 %v1135
      %1527 = vmatprep.subr.bf16.mxu0 %v1142
      %1528 = vmatpush1.bf16.msra.mxu0 %v1141
      %1529 = vmatprep.mubr.bf16.mxu0 %v1414
      %1530 = vmatmul.mubr.bf16.gmra.mrb[0].mxu0 %v1413
      %v1531 = vpop.f32.mrb[0].mxu0
      %v1532 = vadd.f32 0.0, %v1531
      %v1533 = vpop.f32.mrb[0].mxu0
      %v1534 = vadd.f32 0.0, %v1533
      %v1535 = vpop.f32.mrb[0].mxu0
      %v1536 = vpop.f32.mrb[0].mxu0
      %1537 = vdwg.mxu0
      %v1538 = vadd.f32 %v1407, %v1450
      %v1539 = vadd.f32 %v1408, %v1452
      %v1540 = vxor.u32 %v1538, 2147483648
      %v1541 = vxor.u32 %v1539, 2147483648
      %v1542 = vmul.f32 %v1540, 1.442695
      %v1543 = vpow.pop %v1542
      %v1544 = vmul.f32 %v1541, 1.442695
      %v1545 = vpow.pop %v1544
      %v1546 = vadd.f32 %v1543, 1.0
      %v1547 = vadd.f32 %v1545, 1.0
      %v1548 = vrcp.pop %v1546
      %v1549 = vmul.f32 1.0, %v1548
      %v1550 = vrcp.pop %v1547
      %v1551 = vmul.f32 1.0, %v1550
      %v1552 = vadd.f32 %v1409, %v1491
      %v1553 = vadd.f32 %v1410, %v1493
      %v1554 = vxor.u32 %v1552, 2147483648
      %v1555 = vxor.u32 %v1553, 2147483648
      %v1556 = vmul.f32 %v1554, 1.442695
      %v1557 = vpow.pop %v1556
      %v1558 = vmul.f32 %v1555, 1.442695
      %v1559 = vpow.pop %v1558
      %v1560 = vadd.f32 %v1557, 1.0
      %v1561 = vadd.f32 %v1559, 1.0
      %v1562 = vrcp.pop %v1560
      %v1563 = vmul.f32 1.0, %v1562
      %v1564 = vrcp.pop %v1561
      %v1565 = vmul.f32 1.0, %v1564
      %v1566 = vadd.f32 %v1532, %v739
      %v1567 = vadd.f32 %v1534, %v743
      %v1568 = vmul.f32 %v1549, %v1566
      %v1569 = vmul.f32 %v1551, %v1567
      %v1570 = vadd.f32 %v1411, %v1568
      %v1571 = vadd.f32 %v1412, %v1569
      %v1572 = vtanh.pop %v1570
      %v1573 = vtanh.pop %v1571
      %v1574 = vsub.f32 %v1402, %v1572
      %v1575 = vsub.f32 %v1403, %v1573
      %v1576 = vmul.f32 %v1563, %v1574
      %v1577 = vmul.f32 %v1565, %v1575
      %v1578 = vadd.f32 %v1572, %v1576
      %v1579 = vadd.f32 %v1573, %v1577
      %s1580 = smul.u32 2, 6
      %s1581 = smul.addr %s1580, 8
      %s1582 = scalar_lea.vmem [#allocation3], %s1581
      %v1583 = vld [vmem:[%s1582] sm:$0xff]
      %v1584 = vld [vmem:[%s1582 + $0x8] sm:$0xff]
      %v1585 = vld [vmem:[%s1582 + $0x10] sm:$0xff]
      %v1586 = vld [vmem:[%s1582 + $0x18] sm:$0xff]
      %v1587 = vld [vmem:[%s1582 + $0x20] sm:$0xff]
      %v1588 = vld [vmem:[%s1582 + $0x28] sm:$0xff]
      %v1589 = vpack.c.bf16 %v1578, %v1578
      %v1590 = vpack.c.bf16 %v1579, %v1579
      %1591 = vmatprep.subr.bf16.mxu0 %v1048
      %1592 = vmatpush1.bf16.msra.mxu0 %v1047
      %1593 = vmatprep.subr.bf16.mxu0 %v1054
      %1594 = vmatpush1.bf16.msra.mxu0 %v1053
      %1595 = vmatprep.subr.bf16.mxu0 %v1060
      %1596 = vmatpush1.bf16.msra.mxu0 %v1059
      %1597 = vmatprep.subr.bf16.mxu0 %v1066
      %1598 = vmatpush1.bf16.msra.mxu0 %v1065
      %1599 = vmatprep.subr.bf16.mxu0 %v1072
      %1600 = vmatpush1.bf16.msra.mxu0 %v1071
      %1601 = vmatprep.subr.bf16.mxu0 %v1078
      %1602 = vmatpush1.bf16.msra.mxu0 %v1077
      %1603 = vmatprep.subr.bf16.mxu0 %v1084
      %1604 = vmatpush1.bf16.msra.mxu0 %v1083
      %1605 = vmatprep.subr.bf16.mxu0 %v1090
      %1606 = vmatpush1.bf16.msra.mxu0 %v1089
      %1607 = vmatprep.subr.bf16.mxu0 %v1096
      %1608 = vmatpush1.bf16.msra.mxu0 %v1095
      %1609 = vmatprep.subr.bf16.mxu0 %v1102
      %1610 = vmatpush1.bf16.msra.mxu0 %v1101
      %1611 = vmatprep.subr.bf16.mxu0 %v1108
      %1612 = vmatpush1.bf16.msra.mxu0 %v1107
      %1613 = vmatprep.subr.bf16.mxu0 %v1114
      %1614 = vmatpush1.bf16.msra.mxu0 %v1113
      %1615 = vmatprep.subr.bf16.mxu0 %v1120
      %1616 = vmatpush1.bf16.msra.mxu0 %v1119
      %1617 = vmatprep.subr.bf16.mxu0 %v1126
      %1618 = vmatpush1.bf16.msra.mxu0 %v1125
      %1619 = vmatprep.subr.bf16.mxu0 %v1132
      %1620 = vmatpush1.bf16.msra.mxu0 %v1131
      %1621 = vmatprep.subr.bf16.mxu0 %v1138
      %1622 = vmatpush1.bf16.msra.mxu0 %v1137
      %1623 = vmatprep.mubr.bf16.mxu0 %v1590
      %1624 = vmatmul.mubr.bf16.gmra.mrb[0].mxu0 %v1589
      %v1625 = vpop.f32.mrb[0].mxu0
      %v1626 = vadd.f32 0.0, %v1625
      %v1627 = vpop.f32.mrb[0].mxu0
      %v1628 = vadd.f32 0.0, %v1627
      %v1629 = vpop.f32.mrb[0].mxu0
      %v1630 = vpop.f32.mrb[0].mxu0
      %1631 = vdwg.mxu0
      %1632 = vmatprep.subr.bf16.mxu0 %v1050
      %1633 = vmatpush1.bf16.msra.mxu0 %v1049
      %1634 = vmatprep.subr.bf16.mxu0 %v1056
      %1635 = vmatpush1.bf16.msra.mxu0 %v1055
      %1636 = vmatprep.subr.bf16.mxu0 %v1062
      %1637 = vmatpush1.bf16.msra.mxu0 %v1061
      %1638 = vmatprep.subr.bf16.mxu0 %v1068
      %1639 = vmatpush1.bf16.msra.mxu0 %v1067
      %1640 = vmatprep.subr.bf16.mxu0 %v1074
      %1641 = vmatpush1.bf16.msra.mxu0 %v1073
      %1642 = vmatprep.subr.bf16.mxu0 %v1080
      %1643 = vmatpush1.bf16.msra.mxu0 %v1079
      %1644 = vmatprep.subr.bf16.mxu0 %v1086
      %1645 = vmatpush1.bf16.msra.mxu0 %v1085
      %1646 = vmatprep.subr.bf16.mxu0 %v1092
      %1647 = vmatpush1.bf16.msra.mxu0 %v1091
      %1648 = vmatprep.subr.bf16.mxu0 %v1098
      %1649 = vmatpush1.bf16.msra.mxu0 %v1097
      %1650 = vmatprep.subr.bf16.mxu0 %v1104
      %1651 = vmatpush1.bf16.msra.mxu0 %v1103
      %1652 = vmatprep.subr.bf16.mxu0 %v1110
      %1653 = vmatpush1.bf16.msra.mxu0 %v1109
      %1654 = vmatprep.subr.bf16.mxu0 %v1116
      %1655 = vmatpush1.bf16.msra.mxu0 %v1115
      %1656 = vmatprep.subr.bf16.mxu0 %v1122
      %1657 = vmatpush1.bf16.msra.mxu0 %v1121
      %1658 = vmatprep.subr.bf16.mxu0 %v1128
      %1659 = vmatpush1.bf16.msra.mxu0 %v1127
      %1660 = vmatprep.subr.bf16.mxu0 %v1134
      %1661 = vmatpush1.bf16.msra.mxu0 %v1133
      %1662 = vmatprep.subr.bf16.mxu0 %v1140
      %1663 = vmatpush1.bf16.msra.mxu0 %v1139
      %1664 = vmatprep.mubr.bf16.mxu0 %v1590
      %1665 = vmatmul.mubr.bf16.gmra.mrb[0].mxu0 %v1589
      %v1666 = vpop.f32.mrb[0].mxu0
      %v1667 = vadd.f32 0.0, %v1666
      %v1668 = vpop.f32.mrb[0].mxu0
      %v1669 = vadd.f32 0.0, %v1668
      %v1670 = vpop.f32.mrb[0].mxu0
      %v1671 = vpop.f32.mrb[0].mxu0
      %1672 = vdwg.mxu0
      %1673 = vmatprep.subr.bf16.mxu0 %v1052
      %1674 = vmatpush1.bf16.msra.mxu0 %v1051
      %1675 = vmatprep.subr.bf16.mxu0 %v1058
      %1676 = vmatpush1.bf16.msra.mxu0 %v1057
      %1677 = vmatprep.subr.bf16.mxu0 %v1064
      %1678 = vmatpush1.bf16.msra.mxu0 %v1063
      %1679 = vmatprep.subr.bf16.mxu0 %v1070
      %1680 = vmatpush1.bf16.msra.mxu0 %v1069
      %1681 = vmatprep.subr.bf16.mxu0 %v1076
      %1682 = vmatpush1.bf16.msra.mxu0 %v1075
      %1683 = vmatprep.subr.bf16.mxu0 %v1082
      %1684 = vmatpush1.bf16.msra.mxu0 %v1081
      %1685 = vmatprep.subr.bf16.mxu0 %v1088
      %1686 = vmatpush1.bf16.msra.mxu0 %v1087
      %1687 = vmatprep.subr.bf16.mxu0 %v1094
      %1688 = vmatpush1.bf16.msra.mxu0 %v1093
      %1689 = vmatprep.subr.bf16.mxu0 %v1100
      %1690 = vmatpush1.bf16.msra.mxu0 %v1099
      %1691 = vmatprep.subr.bf16.mxu0 %v1106
      %1692 = vmatpush1.bf16.msra.mxu0 %v1105
      %1693 = vmatprep.subr.bf16.mxu0 %v1112
      %1694 = vmatpush1.bf16.msra.mxu0 %v1111
      %1695 = vmatprep.subr.bf16.mxu0 %v1118
      %1696 = vmatpush1.bf16.msra.mxu0 %v1117
      %1697 = vmatprep.subr.bf16.mxu0 %v1124
      %1698 = vmatpush1.bf16.msra.mxu0 %v1123
      %1699 = vmatprep.subr.bf16.mxu0 %v1130
      %1700 = vmatpush1.bf16.msra.mxu0 %v1129
      %1701 = vmatprep.subr.bf16.mxu0 %v1136
      %1702 = vmatpush1.bf16.msra.mxu0 %v1135
      %1703 = vmatprep.subr.bf16.mxu0 %v1142
      %1704 = vmatpush1.bf16.msra.mxu0 %v1141
      %1705 = vmatprep.mubr.bf16.mxu0 %v1590
      %1706 = vmatmul.mubr.bf16.gmra.mrb[0].mxu0 %v1589
      %v1707 = vpop.f32.mrb[0].mxu0
      %v1708 = vadd.f32 0.0, %v1707
      %v1709 = vpop.f32.mrb[0].mxu0
      %v1710 = vadd.f32 0.0, %v1709
      %v1711 = vpop.f32.mrb[0].mxu0
      %v1712 = vpop.f32.mrb[0].mxu0
      %1713 = vdwg.mxu0
      %v1714 = vadd.f32 %v1583, %v1626
      %v1715 = vadd.f32 %v1584, %v1628
      %v1716 = vxor.u32 %v1714, 2147483648
      %v1717 = vxor.u32 %v1715, 2147483648
      %v1718 = vmul.f32 %v1716, 1.442695
      %v1719 = vpow.pop %v1718
      %v1720 = vmul.f32 %v1717, 1.442695
      %v1721 = vpow.pop %v1720
      %v1722 = vadd.f32 %v1719, 1.0
      %v1723 = vadd.f32 %v1721, 1.0
      %v1724 = vrcp.pop %v1722
      %v1725 = vmul.f32 1.0, %v1724
      %v1726 = vrcp.pop %v1723
      %v1727 = vmul.f32 1.0, %v1726
      %v1728 = vadd.f32 %v1585, %v1667
      %v1729 = vadd.f32 %v1586, %v1669
      %v1730 = vxor.u32 %v1728, 2147483648
      %v1731 = vxor.u32 %v1729, 2147483648
      %v1732 = vmul.f32 %v1730, 1.442695
      %v1733 = vpow.pop %v1732
      %v1734 = vmul.f32 %v1731, 1.442695
      %v1735 = vpow.pop %v1734
      %v1736 = vadd.f32 %v1733, 1.0
      %v1737 = vadd.f32 %v1735, 1.0
      %v1738 = vrcp.pop %v1736
      %v1739 = vmul.f32 1.0, %v1738
      %v1740 = vrcp.pop %v1737
      %v1741 = vmul.f32 1.0, %v1740
      %v1742 = vadd.f32 %v1708, %v739
      %v1743 = vadd.f32 %v1710, %v743
      %v1744 = vmul.f32 %v1725, %v1742
      %v1745 = vmul.f32 %v1727, %v1743
      %v1746 = vadd.f32 %v1587, %v1744
      %v1747 = vadd.f32 %v1588, %v1745
      %v1748 = vtanh.pop %v1746
      %v1749 = vtanh.pop %v1747
      %v1750 = vsub.f32 %v1578, %v1748
      %v1751 = vsub.f32 %v1579, %v1749
      %v1752 = vmul.f32 %v1739, %v1750
      %v1753 = vmul.f32 %v1741, %v1751
      %v1754 = vadd.f32 %v1748, %v1752
      %v1755 = vadd.f32 %v1749, %v1753
      %s1756 = smul.u32 3, 6
      %s1757 = smul.addr %s1756, 8
      %s1758 = scalar_lea.vmem [#allocation3], %s1757
      %v1759 = vld [vmem:[%s1758] sm:$0xff]
      %v1760 = vld [vmem:[%s1758 + $0x8] sm:$0xff]
      %v1761 = vld [vmem:[%s1758 + $0x10] sm:$0xff]
      %v1762 = vld [vmem:[%s1758 + $0x18] sm:$0xff]
      %v1763 = vld [vmem:[%s1758 + $0x20] sm:$0xff]
      %v1764 = vld [vmem:[%s1758 + $0x28] sm:$0xff]
      %v1765 = vpack.c.bf16 %v1754, %v1754
      %v1766 = vpack.c.bf16 %v1755, %v1755
      %1767 = vmatprep.subr.bf16.mxu0 %v1048
      %1768 = vmatpush1.bf16.msra.mxu0 %v1047
      %1769 = vmatprep.subr.bf16.mxu0 %v1054
      %1770 = vmatpush1.bf16.msra.mxu0 %v1053
      %1771 = vmatprep.subr.bf16.mxu0 %v1060
      %1772 = vmatpush1.bf16.msra.mxu0 %v1059
      %1773 = vmatprep.subr.bf16.mxu0 %v1066
      %1774 = vmatpush1.bf16.msra.mxu0 %v1065
      %1775 = vmatprep.subr.bf16.mxu0 %v1072
      %1776 = vmatpush1.bf16.msra.mxu0 %v1071
      %1777 = vmatprep.subr.bf16.mxu0 %v1078
      %1778 = vmatpush1.bf16.msra.mxu0 %v1077
      %1779 = vmatprep.subr.bf16.mxu0 %v1084
      %1780 = vmatpush1.bf16.msra.mxu0 %v1083
      %1781 = vmatprep.subr.bf16.mxu0 %v1090
      %1782 = vmatpush1.bf16.msra.mxu0 %v1089
      %1783 = vmatprep.subr.bf16.mxu0 %v1096
      %1784 = vmatpush1.bf16.msra.mxu0 %v1095
      %1785 = vmatprep.subr.bf16.mxu0 %v1102
      %1786 = vmatpush1.bf16.msra.mxu0 %v1101
      %1787 = vmatprep.subr.bf16.mxu0 %v1108
      %1788 = vmatpush1.bf16.msra.mxu0 %v1107
      %1789 = vmatprep.subr.bf16.mxu0 %v1114
      %1790 = vmatpush1.bf16.msra.mxu0 %v1113
      %1791 = vmatprep.subr.bf16.mxu0 %v1120
      %1792 = vmatpush1.bf16.msra.mxu0 %v1119
      %1793 = vmatprep.subr.bf16.mxu0 %v1126
      %1794 = vmatpush1.bf16.msra.mxu0 %v1125
      %1795 = vmatprep.subr.bf16.mxu0 %v1132
      %1796 = vmatpush1.bf16.msra.mxu0 %v1131
      %1797 = vmatprep.subr.bf16.mxu0 %v1138
      %1798 = vmatpush1.bf16.msra.mxu0 %v1137
      %1799 = vmatprep.mubr.bf16.mxu0 %v1766
      %1800 = vmatmul.mubr.bf16.gmra.mrb[0].mxu0 %v1765
      %v1801 = vpop.f32.mrb[0].mxu0
      %v1802 = vadd.f32 0.0, %v1801
      %v1803 = vpop.f32.mrb[0].mxu0
      %v1804 = vadd.f32 0.0, %v1803
      %v1805 = vpop.f32.mrb[0].mxu0
      %v1806 = vpop.f32.mrb[0].mxu0
      %1807 = vdwg.mxu0
      %1808 = vmatprep.subr.bf16.mxu0 %v1050
      %1809 = vmatpush1.bf16.msra.mxu0 %v1049
      %1810 = vmatprep.subr.bf16.mxu0 %v1056
      %1811 = vmatpush1.bf16.msra.mxu0 %v1055
      %1812 = vmatprep.subr.bf16.mxu0 %v1062
      %1813 = vmatpush1.bf16.msra.mxu0 %v1061
      %1814 = vmatprep.subr.bf16.mxu0 %v1068
      %1815 = vmatpush1.bf16.msra.mxu0 %v1067
      %1816 = vmatprep.subr.bf16.mxu0 %v1074
      %1817 = vmatpush1.bf16.msra.mxu0 %v1073
      %1818 = vmatprep.subr.bf16.mxu0 %v1080
      %1819 = vmatpush1.bf16.msra.mxu0 %v1079
      %1820 = vmatprep.subr.bf16.mxu0 %v1086
      %1821 = vmatpush1.bf16.msra.mxu0 %v1085
      %1822 = vmatprep.subr.bf16.mxu0 %v1092
      %1823 = vmatpush1.bf16.msra.mxu0 %v1091
      %1824 = vmatprep.subr.bf16.mxu0 %v1098
      %1825 = vmatpush1.bf16.msra.mxu0 %v1097
      %1826 = vmatprep.subr.bf16.mxu0 %v1104
      %1827 = vmatpush1.bf16.msra.mxu0 %v1103
      %1828 = vmatprep.subr.bf16.mxu0 %v1110
      %1829 = vmatpush1.bf16.msra.mxu0 %v1109
      %1830 = vmatprep.subr.bf16.mxu0 %v1116
      %1831 = vmatpush1.bf16.msra.mxu0 %v1115
      %1832 = vmatprep.subr.bf16.mxu0 %v1122
      %1833 = vmatpush1.bf16.msra.mxu0 %v1121
      %1834 = vmatprep.subr.bf16.mxu0 %v1128
      %1835 = vmatpush1.bf16.msra.mxu0 %v1127
      %1836 = vmatprep.subr.bf16.mxu0 %v1134
      %1837 = vmatpush1.bf16.msra.mxu0 %v1133
      %1838 = vmatprep.subr.bf16.mxu0 %v1140
      %1839 = vmatpush1.bf16.msra.mxu0 %v1139
      %1840 = vmatprep.mubr.bf16.mxu0 %v1766
      %1841 = vmatmul.mubr.bf16.gmra.mrb[0].mxu0 %v1765
      %v1842 = vpop.f32.mrb[0].mxu0
      %v1843 = vadd.f32 0.0, %v1842
      %v1844 = vpop.f32.mrb[0].mxu0
      %v1845 = vadd.f32 0.0, %v1844
      %v1846 = vpop.f32.mrb[0].mxu0
      %v1847 = vpop.f32.mrb[0].mxu0
      %1848 = vdwg.mxu0
      %1849 = vmatprep.subr.bf16.mxu0 %v1052
      %1850 = vmatpush1.bf16.msra.mxu0 %v1051
      %1851 = vmatprep.subr.bf16.mxu0 %v1058
      %1852 = vmatpush1.bf16.msra.mxu0 %v1057
      %1853 = vmatprep.subr.bf16.mxu0 %v1064
      %1854 = vmatpush1.bf16.msra.mxu0 %v1063
      %1855 = vmatprep.subr.bf16.mxu0 %v1070
      %1856 = vmatpush1.bf16.msra.mxu0 %v1069
      %1857 = vmatprep.subr.bf16.mxu0 %v1076
      %1858 = vmatpush1.bf16.msra.mxu0 %v1075
      %1859 = vmatprep.subr.bf16.mxu0 %v1082
      %1860 = vmatpush1.bf16.msra.mxu0 %v1081
      %1861 = vmatprep.subr.bf16.mxu0 %v1088
      %1862 = vmatpush1.bf16.msra.mxu0 %v1087
      %1863 = vmatprep.subr.bf16.mxu0 %v1094
      %1864 = vmatpush1.bf16.msra.mxu0 %v1093
      %1865 = vmatprep.subr.bf16.mxu0 %v1100
      %1866 = vmatpush1.bf16.msra.mxu0 %v1099
      %1867 = vmatprep.subr.bf16.mxu0 %v1106
      %1868 = vmatpush1.bf16.msra.mxu0 %v1105
      %1869 = vmatprep.subr.bf16.mxu0 %v1112
      %1870 = vmatpush1.bf16.msra.mxu0 %v1111
      %1871 = vmatprep.subr.bf16.mxu0 %v1118
      %1872 = vmatpush1.bf16.msra.mxu0 %v1117
      %1873 = vmatprep.subr.bf16.mxu0 %v1124
      %1874 = vmatpush1.bf16.msra.mxu0 %v1123
      %1875 = vmatprep.subr.bf16.mxu0 %v1130
      %1876 = vmatpush1.bf16.msra.mxu0 %v1129
      %1877 = vmatprep.subr.bf16.mxu0 %v1136
      %1878 = vmatpush1.bf16.msra.mxu0 %v1135
      %1879 = vmatprep.subr.bf16.mxu0 %v1142
      %1880 = vmatpush1.bf16.msra.mxu0 %v1141
      %1881 = vmatprep.mubr.bf16.mxu0 %v1766
      %1882 = vmatmul.mubr.bf16.gmra.mrb[0].mxu0 %v1765
      %v1883 = vpop.f32.mrb[0].mxu0
      %v1884 = vadd.f32 0.0, %v1883
      %v1885 = vpop.f32.mrb[0].mxu0
      %v1886 = vadd.f32 0.0, %v1885
      %v1887 = vpop.f32.mrb[0].mxu0
      %v1888 = vpop.f32.mrb[0].mxu0
      %1889 = vdwg.mxu0
      %v1890 = vadd.f32 %v1759, %v1802
      %v1891 = vadd.f32 %v1760, %v1804
      %v1892 = vxor.u32 %v1890, 2147483648
      %v1893 = vxor.u32 %v1891, 2147483648
      %v1894 = vmul.f32 %v1892, 1.442695
      %v1895 = vpow.pop %v1894
      %v1896 = vmul.f32 %v1893, 1.442695
      %v1897 = vpow.pop %v1896
      %v1898 = vadd.f32 %v1895, 1.0
      %v1899 = vadd.f32 %v1897, 1.0
      %v1900 = vrcp.pop %v1898
      %v1901 = vmul.f32 1.0, %v1900
      %v1902 = vrcp.pop %v1899
      %v1903 = vmul.f32 1.0, %v1902
      %v1904 = vadd.f32 %v1761, %v1843
      %v1905 = vadd.f32 %v1762, %v1845
      %v1906 = vxor.u32 %v1904, 2147483648
      %v1907 = vxor.u32 %v1905, 2147483648
      %v1908 = vmul.f32 %v1906, 1.442695
      %v1909 = vpow.pop %v1908
      %v1910 = vmul.f32 %v1907, 1.442695
      %v1911 = vpow.pop %v1910
      %v1912 = vadd.f32 %v1909, 1.0
      %v1913 = vadd.f32 %v1911, 1.0
      %v1914 = vrcp.pop %v1912
      %v1915 = vmul.f32 1.0, %v1914
      %v1916 = vrcp.pop %v1913
      %v1917 = vmul.f32 1.0, %v1916
      %v1918 = vadd.f32 %v1884, %v739
      %v1919 = vadd.f32 %v1886, %v743
      %v1920 = vmul.f32 %v1901, %v1918
      %v1921 = vmul.f32 %v1903, %v1919
      %v1922 = vadd.f32 %v1763, %v1920
      %v1923 = vadd.f32 %v1764, %v1921
      %v1924 = vtanh.pop %v1922
      %v1925 = vtanh.pop %v1923
      %v1926 = vsub.f32 %v1754, %v1924
      %v1927 = vsub.f32 %v1755, %v1925
      %v1928 = vmul.f32 %v1915, %v1926
      %v1929 = vmul.f32 %v1917, %v1927
      %v1930 = vadd.f32 %v1924, %v1928
      %v1931 = vadd.f32 %v1925, %v1929
      %1932 = vst [vmem:[#allocation2] sm:$0xff] %v1930
      %1933 = vst [vmem:[#allocation2 + $0x8] sm:$0xff] %v1931
      %p1934 = scmp.eq.s32.totalorder %s25, 1
      // Predicated region
      $region61: #{duel_q_gru_forward.1} parent=55 // pred_check
        %p1935 = pneg %p1934
      $region62: #{duel_q_gru_forward.1} parent=55 // pred_check_branch
        %1937 = sbr.rel (%p1935) target = $region64
      $region63: #{duel_q_gru_forward.1} parent=55 // pred_region
        %v1938 = vpack.c.bf16 %v1930, %v1930
        %v1939 = vpack.c.bf16 %v1931, %v1931
        %v1940 = vld [vmem:[%s5] sm:$0xff]
        %v1941 = vld [vmem:[%s5 + $0x8] sm:$0xff]
        %v1942 = vld [vmem:[%s5 + $0x10] sm:$0xff]
        %v1943 = vld [vmem:[%s5 + $0x18] sm:$0xff]
        %v1944 = vld [vmem:[%s5 + $0x20] sm:$0xff]
        %v1945 = vld [vmem:[%s5 + $0x28] sm:$0xff]
        %v1946 = vld [vmem:[%s5 + $0x30] sm:$0xff]
        %v1947 = vld [vmem:[%s5 + $0x38] sm:$0xff]
        %v1948 = vld [vmem:[%s5 + $0x40] sm:$0xff]
        %v1949 = vld [vmem:[%s5 + $0x48] sm:$0xff]
        %v1950 = vld [vmem:[%s5 + $0x50] sm:$0xff]
        %v1951 = vld [vmem:[%s5 + $0x58] sm:$0xff]
        %v1952 = vld [vmem:[%s5 + $0x60] sm:$0xff]
        %v1953 = vld [vmem:[%s5 + $0x68] sm:$0xff]
        %v1954 = vld [vmem:[%s5 + $0x70] sm:$0xff]
        %v1955 = vld [vmem:[%s5 + $0x78] sm:$0xff]
        %v1956 = vld [vmem:[%s5 + $0x80] sm:$0xff]
        %v1957 = vld [vmem:[%s5 + $0x88] sm:$0xff]
        %v1958 = vld [vmem:[%s5 + $0x90] sm:$0xff]
        %v1959 = vld [vmem:[%s5 + $0x98] sm:$0xff]
        %v1960 = vld [vmem:[%s5 + $0xa0] sm:$0xff]
        %v1961 = vld [vmem:[%s5 + $0xa8] sm:$0xff]
        %v1962 = vld [vmem:[%s5 + $0xb0] sm:$0xff]
        %v1963 = vld [vmem:[%s5 + $0xb8] sm:$0xff]
        %v1964 = vld [vmem:[%s5 + $0xc0] sm:$0xff]
        %v1965 = vld [vmem:[%s5 + $0xc8] sm:$0xff]
        %v1966 = vld [vmem:[%s5 + $0xd0] sm:$0xff]
        %v1967 = vld [vmem:[%s5 + $0xd8] sm:$0xff]
        %v1968 = vld [vmem:[%s5 + $0xe0] sm:$0xff]
        %v1969 = vld [vmem:[%s5 + $0xe8] sm:$0xff]
        %v1970 = vld [vmem:[%s5 + $0xf0] sm:$0xff]
        %v1971 = vld [vmem:[%s5 + $0xf8] sm:$0xff]
        %v1972 = vld [vmem:[%s6] sm:$0x3]
        %v1974 = vlaneseq
        %v1975 = vshrl.u32 %v1974, 7
        %v1976 = vsub.s32 0, %v1975
        %v1977 = vrot.slane %v1972, %v1976
        %v1978 = vlaneseq
        %v1979 = vshrl.u32 %v1978, 7
        %v1980 = vsub.s32 1, %v1979
        %v1981 = vrot.slane %v1972, %v1980
        %v2016 = vunpack.c.l.b16 %v1940
        %v2017 = vunpack.c.h.b16 %v1940
        %v2018 = vunpack.c.l.b16 %v1941
        %v2019 = vunpack.c.h.b16 %v1941
        %v2020 = vunpack.c.l.b16 %v1942
        %v2021 = vunpack.c.h.b16 %v1942
        %v2022 = vunpack.c.l.b16 %v1943
        %v2023 = vunpack.c.h.b16 %v1943
        %v2024 = vunpack.c.l.b16 %v1944
        %v2025 = vunpack.c.h.b16 %v1944
        %v2026 = vunpack.c.l.b16 %v1945
        %v2027 = vunpack.c.h.b16 %v1945
        %v2028 = vunpack.c.l.b16 %v1946
        %v2029 = vunpack.c.h.b16 %v1946
        %v2030 = vunpack.c.l.b16 %v1947
        %v2031 = vunpack.c.h.b16 %v1947
        %v2032 = vunpack.c.l.b16 %v1948
        %v2033 = vunpack.c.h.b16 %v1948
        %v2034 = vunpack.c.l.b16 %v1949
        %v2035 = vunpack.c.h.b16 %v1949
        %v2036 = vunpack.c.l.b16 %v1950
        %v2037 = vunpack.c.h.b16 %v1950
        %v2038 = vunpack.c.l.b16 %v1951
        %v2039 = vunpack.c.h.b16 %v1951
        %v2040 = vunpack.c.l.b16 %v1952
        %v2041 = vunpack.c.h.b16 %v1952
        %v2042 = vunpack.c.l.b16 %v1953
        %v2043 = vunpack.c.h.b16 %v1953
        %v2044 = vunpack.c.l.b16 %v1954
        %v2045 = vunpack.c.h.b16 %v1954
        %v2046 = vunpack.c.l.b16 %v1955
        %v2047 = vunpack.c.h.b16 %v1955
        %v2048 = vunpack.c.l.b16 %v1956
        %v2049 = vunpack.c.h.b16 %v1956
        %v2050 = vunpack.c.l.b16 %v1957
        %v2051 = vunpack.c.h.b16 %v1957
        %v2052 = vunpack.c.l.b16 %v1958
        %v2053 = vunpack.c.h.b16 %v1958
        %v2054 = vunpack.c.l.b16 %v1959
        %v2055 = vunpack.c.h.b16 %v1959
        %v2056 = vunpack.c.l.b16 %v1960
        %v2057 = vunpack.c.h.b16 %v1960
        %v2058 = vunpack.c.l.b16 %v1961
        %v2059 = vunpack.c.h.b16 %v1961
        %v2060 = vunpack.c.l.b16 %v1962
        %v2061 = vunpack.c.h.b16 %v1962
        %v2062 = vunpack.c.l.b16 %v1963
        %v2063 = vunpack.c.h.b16 %v1963
        %v2064 = vunpack.c.l.b16 %v1964
        %v2065 = vunpack.c.h.b16 %v1964
        %v2066 = vunpack.c.l.b16 %v1965
        %v2067 = vunpack.c.h.b16 %v1965
        %v2068 = vunpack.c.l.b16 %v1966
        %v2069 = vunpack.c.h.b16 %v1966
        %v2070 = vunpack.c.l.b16 %v1967
        %v2071 = vunpack.c.h.b16 %v1967
        %v2072 = vunpack.c.l.b16 %v1968
        %v2073 = vunpack.c.h.b16 %v1968
        %v2074 = vunpack.c.l.b16 %v1969
        %v2075 = vunpack.c.h.b16 %v1969
        %v2076 = vunpack.c.l.b16 %v1970
        %v2077 = vunpack.c.h.b16 %v1970
        %v2078 = vunpack.c.l.b16 %v1971
        %v2079 = vunpack.c.h.b16 %v1971
        %v2080 = vpack.c.b16 %v2018, %v2016
        %v2081 = vpack.c.b16 %v2019, %v2017
        %v2082 = vpack.c.b16 %v2022, %v2020
        %v2083 = vpack.c.b16 %v2023, %v2021
        %v2084 = vpack.c.b16 %v2026, %v2024
        %v2085 = vpack.c.b16 %v2027, %v2025
        %v2086 = vpack.c.b16 %v2030, %v2028
        %v2087 = vpack.c.b16 %v2031, %v2029
        %v2088 = vpack.c.b16 %v2034, %v2032
        %v2089 = vpack.c.b16 %v2035, %v2033
        %v2090 = vpack.c.b16 %v2038, %v2036
        %v2091 = vpack.c.b16 %v2039, %v2037
        %v2092 = vpack.c.b16 %v2042, %v2040
        %v2093 = vpack.c.b16 %v2043, %v2041
        %v2094 = vpack.c.b16 %v2046, %v2044
        %v2095 = vpack.c.b16 %v2047, %v2045
        %v2096 = vpack.c.b16 %v2050, %v2048
        %v2097 = vpack.c.b16 %v2051, %v2049
        %v2098 = vpack.c.b16 %v2054, %v2052
        %v2099 = vpack.c.b16 %v2055, %v2053
        %v2100 = vpack.c.b16 %v2058, %v2056
        %v2101 = vpack.c.b16 %v2059, %v2057
        %v2102 = vpack.c.b16 %v2062, %v2060
        %v2103 = vpack.c.b16 %v2063, %v2061
        %v2104 = vpack.c.b16 %v2066, %v2064
        %v2105 = vpack.c.b16 %v2067, %v2065
        %v2106 = vpack.c.b16 %v2070, %v2068
        %v2107 = vpack.c.b16 %v2071, %v2069
        %v2108 = vpack.c.b16 %v2074, %v2072
        %v2109 = vpack.c.b16 %v2075, %v2073
        %v2110 = vpack.c.b16 %v2078, %v2076
        %v2111 = vpack.c.b16 %v2079, %v2077
        %2144 = vmatprep.subr.bf16.mxu0 %v2081
        %2145 = vmatpush1.bf16.msra.mxu0 %v2080
        %2146 = vmatprep.subr.bf16.mxu0 %v2083
        %2147 = vmatpush1.bf16.msra.mxu0 %v2082
        %2148 = vmatprep.subr.bf16.mxu0 %v2085
        %2149 = vmatpush1.bf16.msra.mxu0 %v2084
        %2150 = vmatprep.subr.bf16.mxu0 %v2087
        %2151 = vmatpush1.bf16.msra.mxu0 %v2086
        %2152 = vmatprep.subr.bf16.mxu0 %v2089
        %2153 = vmatpush1.bf16.msra.mxu0 %v2088
        %2154 = vmatprep.subr.bf16.mxu0 %v2091
        %2155 = vmatpush1.bf16.msra.mxu0 %v2090
        %2156 = vmatprep.subr.bf16.mxu0 %v2093
        %2157 = vmatpush1.bf16.msra.mxu0 %v2092
        %2158 = vmatprep.subr.bf16.mxu0 %v2095
        %2159 = vmatpush1.bf16.msra.mxu0 %v2094
        %2160 = vmatprep.subr.bf16.mxu0 %v2097
        %2161 = vmatpush1.bf16.msra.mxu0 %v2096
        %2162 = vmatprep.subr.bf16.mxu0 %v2099
        %2163 = vmatpush1.bf16.msra.mxu0 %v2098
        %2164 = vmatprep.subr.bf16.mxu0 %v2101
        %2165 = vmatpush1.bf16.msra.mxu0 %v2100
        %2166 = vmatprep.subr.bf16.mxu0 %v2103
        %2167 = vmatpush1.bf16.msra.mxu0 %v2102
        %2168 = vmatprep.subr.bf16.mxu0 %v2105
        %2169 = vmatpush1.bf16.msra.mxu0 %v2104
        %2170 = vmatprep.subr.bf16.mxu0 %v2107
        %2171 = vmatpush1.bf16.msra.mxu0 %v2106
        %2172 = vmatprep.subr.bf16.mxu0 %v2109
        %2173 = vmatpush1.bf16.msra.mxu0 %v2108
        %2174 = vmatprep.subr.bf16.mxu0 %v2111
        %2175 = vmatpush1.bf16.msra.mxu0 %v2110
        %2176 = vmatprep.mubr.bf16.mxu0 %v1939
        %2177 = vmatmul.mubr.bf16.gmra.mrb[0].mxu0 %v1938
        %v2178 = vpop.f32.mrb[0].mxu0
        %v2179 = vadd.f32 %v1977, %v2178
        %v2180 = vpop.f32.mrb[0].mxu0
        %v2181 = vadd.f32 %v1981, %v2180
        %v2182 = vpop.f32.mrb[0].mxu0
        %v2183 = vpop.f32.mrb[0].mxu0
        %2184 = vdwg.mxu0
        %v2185 = vmax.f32 %v2179, 0.0
        %v2186 = vmax.f32 %v2181, 0.0
        %v2187 = vpack.c.bf16 %v2185, %v2185
        %v2188 = vpack.c.bf16 %v2186, %v2186
        %v2189 = vld [vmem:[%s7] sm:$0xf]
        %v2190 = vld [vmem:[%s7 + $0x4] sm:$0xf]
        %v2191 = vld [vmem:[%s7 + $0x8] sm:$0xf]
        %v2192 = vld [vmem:[%s7 + $0xc] sm:$0xf]
        %v2193 = vld [vmem:[%s7 + $0x10] sm:$0xf]
        %v2194 = vld [vmem:[%s7 + $0x14] sm:$0xf]
        %v2195 = vld [vmem:[%s7 + $0x18] sm:$0xf]
        %v2196 = vld [vmem:[%s7 + $0x1c] sm:$0xf]
        %v2197 = vld [vmem:[%s7 + $0x20] sm:$0xf]
        %v2198 = vld [vmem:[%s7 + $0x24] sm:$0xf]
        %v2199 = vld [vmem:[%s7 + $0x28] sm:$0xf]
        %v2200 = vld [vmem:[%s7 + $0x2c] sm:$0xf]
        %v2201 = vld [vmem:[%s7 + $0x30] sm:$0xf]
        %v2202 = vld [vmem:[%s7 + $0x34] sm:$0xf]
        %v2203 = vld [vmem:[%s7 + $0x38] sm:$0xf]
        %v2204 = vld [vmem:[%s7 + $0x3c] sm:$0xf]
        %v2205 = vld [vmem:[%s7 + $0x40] sm:$0xf]
        %v2206 = vld [vmem:[%s7 + $0x44] sm:$0xf]
        %v2207 = vld [vmem:[%s7 + $0x48] sm:$0xf]
        %v2208 = vld [vmem:[%s7 + $0x4c] sm:$0xf]
        %v2209 = vld [vmem:[%s7 + $0x50] sm:$0xf]
        %v2210 = vld [vmem:[%s7 + $0x54] sm:$0xf]
        %v2211 = vld [vmem:[%s7 + $0x58] sm:$0xf]
        %v2212 = vld [vmem:[%s7 + $0x5c] sm:$0xf]
        %v2213 = vld [vmem:[%s7 + $0x60] sm:$0xf]
        %v2214 = vld [vmem:[%s7 + $0x64] sm:$0xf]
        %v2215 = vld [vmem:[%s7 + $0x68] sm:$0xf]
        %v2216 = vld [vmem:[%s7 + $0x6c] sm:$0xf]
        %v2217 = vld [vmem:[%s7 + $0x70] sm:$0xf]
        %v2218 = vld [vmem:[%s7 + $0x74] sm:$0xf]
        %v2219 = vld [vmem:[%s7 + $0x78] sm:$0xf]
        %v2220 = vld [vmem:[%s7 + $0x7c] sm:$0xf]
        %v2221 = vld [vmem:[%s8] sm:$0x1]
        %v2223 = vlaneseq
        %v2224 = vshrl.u32 %v2223, 7
        %v2225 = vsub.s32 0, %v2224
        %v2226 = vrot.slane %v2221, %v2225
        %v2260 = vunpack.c.l.b16 %v2189
        %v2261 = vunpack.c.l.b16 %v2190
        %v2262 = vunpack.c.l.b16 %v2191
        %v2263 = vunpack.c.l.b16 %v2192
        %v2264 = vunpack.c.l.b16 %v2193
        %v2265 = vunpack.c.l.b16 %v2194
        %v2266 = vunpack.c.l.b16 %v2195
        %v2267 = vunpack.c.l.b16 %v2196
        %v2268 = vunpack.c.l.b16 %v2197
        %v2269 = vunpack.c.l.b16 %v2198
        %v2270 = vunpack.c.l.b16 %v2199
        %v2271 = vunpack.c.l.b16 %v2200
        %v2272 = vunpack.c.l.b16 %v2201
        %v2273 = vunpack.c.l.b16 %v2202
        %v2274 = vunpack.c.l.b16 %v2203
        %v2275 = vunpack.c.l.b16 %v2204
        %v2276 = vunpack.c.l.b16 %v2205
        %v2277 = vunpack.c.l.b16 %v2206
        %v2278 = vunpack.c.l.b16 %v2207
        %v2279 = vunpack.c.l.b16 %v2208
        %v2280 = vunpack.c.l.b16 %v2209
        %v2281 = vunpack.c.l.b16 %v2210
        %v2282 = vunpack.c.l.b16 %v2211
        %v2283 = vunpack.c.l.b16 %v2212
        %v2284 = vunpack.c.l.b16 %v2213
        %v2285 = vunpack.c.l.b16 %v2214
        %v2286 = vunpack.c.l.b16 %v2215
        %v2287 = vunpack.c.l.b16 %v2216
        %v2288 = vunpack.c.l.b16 %v2217
        %v2289 = vunpack.c.l.b16 %v2218
        %v2290 = vunpack.c.l.b16 %v2219
        %v2291 = vunpack.c.l.b16 %v2220
        %v2292 = vpack.c.b16 %v2261, %v2260
        %v2293 = vpack.c.b16 %v2263, %v2262
        %v2294 = vpack.c.b16 %v2265, %v2264
        %v2295 = vpack.c.b16 %v2267, %v2266
        %v2296 = vpack.c.b16 %v2269, %v2268
        %v2297 = vpack.c.b16 %v2271, %v2270
        %v2298 = vpack.c.b16 %v2273, %v2272
        %v2299 = vpack.c.b16 %v2275, %v2274
        %v2300 = vpack.c.b16 %v2277, %v2276
        %v2301 = vpack.c.b16 %v2279, %v2278
        %v2302 = vpack.c.b16 %v2281, %v2280
        %v2303 = vpack.c.b16 %v2283, %v2282
        %v2304 = vpack.c.b16 %v2285, %v2284
        %v2305 = vpack.c.b16 %v2287, %v2286
        %v2306 = vpack.c.b16 %v2289, %v2288
        %v2307 = vpack.c.b16 %v2291, %v2290
        %2324 = vmatprep.subr.bf16.mxu0 0
        %2325 = vmatpush1.bf16.msra.mxu0 %v2292
        %2326 = vmatprep.subr.bf16.mxu0 0
        %2327 = vmatpush1.bf16.msra.mxu0 %v2293
        %2328 = vmatprep.subr.bf16.mxu0 0
        %2329 = vmatpush1.bf16.msra.mxu0 %v2294
        %2330 = vmatprep.subr.bf16.mxu0 0
        %2331 = vmatpush1.bf16.msra.mxu0 %v2295
        %2332 = vmatprep.subr.bf16.mxu0 0
        %2333 = vmatpush1.bf16.msra.mxu0 %v2296
        %2334 = vmatprep.subr.bf16.mxu0 0
        %2335 = vmatpush1.bf16.msra.mxu0 %v2297
        %2336 = vmatprep.subr.bf16.mxu0 0
        %2337 = vmatpush1.bf16.msra.mxu0 %v2298
        %2338 = vmatprep.subr.bf16.mxu0 0
        %2339 = vmatpush1.bf16.msra.mxu0 %v2299
        %2340 = vmatprep.subr.bf16.mxu0 0
        %2341 = vmatpush1.bf16.msra.mxu0 %v2300
        %2342 = vmatprep.subr.bf16.mxu0 0
        %2343 = vmatpush1.bf16.msra.mxu0 %v2301
        %2344 = vmatprep.subr.bf16.mxu0 0
        %2345 = vmatpush1.bf16.msra.mxu0 %v2302
        %2346 = vmatprep.subr.bf16.mxu0 0
        %2347 = vmatpush1.bf16.msra.mxu0 %v2303
        %2348 = vmatprep.subr.bf16.mxu0 0
        %2349 = vmatpush1.bf16.msra.mxu0 %v2304
        %2350 = vmatprep.subr.bf16.mxu0 0
        %2351 = vmatpush1.bf16.msra.mxu0 %v2305
        %2352 = vmatprep.subr.bf16.mxu0 0
        %2353 = vmatpush1.bf16.msra.mxu0 %v2306
        %2354 = vmatprep.subr.bf16.mxu0 0
        %2355 = vmatpush1.bf16.msra.mxu0 %v2307
        %2356 = vmatprep.mubr.bf16.mxu0 %v2188
        %2357 = vmatmul.mubr.bf16.gmra.mrb[0].mxu0 %v2187
        %v2358 = vpop.f32.mrb[0].mxu0
        %v2359 = vadd.f32 %v2226, %v2358
        %v2360 = vpop.f32.mrb[0].mxu0
        %v2361 = vpop.f32.mrb[0].mxu0
        %v2362 = vpop.f32.mrb[0].mxu0
        %2363 = vdwg.mxu0
        %2364 = vadd.xlane.f32.xlu0 %v2359
        %v2365 = vpop.xlane.xlu0 %2364
        %v2366 = vsub.f32 %v2365, %v2359
        %v2367 = vmul.f32 %v2366, 0.25
        %2369 = vset.pattern.permute.xlu0 127
        %2370 = vperm.xlu0 %2369, %v2367
        %v2371 = vpop.permute.xlu0 %2370
        %v2373 = vsub.f32 %v2359, %v2371
        %2375 = vset.pattern.permute.xlu0 127
        %2376 = vperm.xlu0 %2375, %v2359
        %v2377 = vpop.permute.xlu0 %2376
        %v2379 = vadd.f32 %v2377, %v2373
        %2380 = vst [vmem:[%s358] sm:$0xff] %v2379
      $region64: #{duel_q_gru_forward.1} parent=55 // pred_fallthru
        _
      %p2381 = scmp.lt.s32.totalorder %s24, 0
      %s2382 = scalar_select %p2381, %s24, 0
      %s2383 = smul.addr %s2382, 8
      %s2384 = scalar_lea.vmem %s9, %s2383
      // Predicated region
      $region65: #{duel_q_gru_forward.1} parent=55 // pred_check
        %p2385 = pneg %p246
      $region66: #{duel_q_gru_forward.1} parent=55 // pred_check_branch
        %2387 = sbr.rel (%p2385) target = $region68
      $region67: #{duel_q_gru_forward.1} parent=55 // pred_region
        _
      $region68: #{duel_q_gru_forward.1} parent=55 // pred_fallthru
        _
      // Predicated region
      $region69: #{duel_q_gru_forward.1} parent=55 // pred_check
        %p2388 = pneg %p246
      $region70: #{duel_q_gru_forward.1} parent=55 // pred_check_branch
        %2390 = sbr.rel (%p2388) target = $region72
      $region71: #{duel_q_gru_forward.1} parent=55 // pred_region
        %p2391 = scmp.lt.s32.totalorder %s24, 0
        %s2392 = scalar_select %p2391, %s24, 0
        %s2393 = smul.addr %s2392, 8
        %s2394 = scalar_lea.vmem %s9, %s2393
      $region72: #{duel_q_gru_forward.1} parent=55 // pred_fallthru
        _
    $region56: #{duel_q_gru_forward.1} parent=5 // pred_fallthru
      _
    %p2395 = scmp.le.s32.totalorder 2, %s15
    // Predicated region
    $region73: #{duel_q_gru_forward.1} parent=5 // pred_check
      %p2396 = pneg %p2395
    $region74: #{duel_q_gru_forward.1} parent=5 // pred_check_branch
      %2398 = sbr.rel (%p2396) target = $region76
    $region75: #{duel_q_gru_forward.1} parent=5 // pred_region
      %s2399 = ssub.s32 %s15, 2
    $region76: #{duel_q_gru_forward.1} parent=5 // pred_fallthru
      _
  $region6: #{duel_q_gru_forward.1} parent=0 // loop_footer
    %s19 = sadd.s32 1, %s15
  $region7: #{duel_q_gru_forward.1} parent=0 // loop_footer_branch
    %14 = sbr.rel target = $region3
  $region8: #{duel_q_gru_forward.1} parent=0 // loop_exit
    _

</llo_original>
